<compile_context>
chip_gen: v7x
topology: tpu7x:2x2x1
jax: 0.10.0
libtpu: 0.0.40
codegen_flags: <defaults>
</compile_context>

<pallas_src>
import jax
import jax.numpy as jnp
from jax.experimental import pallas as pl
from jax.experimental.pallas import tpu as pltpu

LANE = 128      # all hidden/output widths padded to one lane group
SUBLANE = 8     # f32 sublane multiple for the batch tile


def _round_up(n, m):
    return ((n + m - 1) // m) * m


def _default_min_grid():
    """v7x has 2 TensorCores per chip -> keep >=2 grid steps so the 'parallel'
    batch axis can shard across them. v5e/v6e have 1 TC -> grid=1 is optimal."""
    try:
        kind = jax.devices()[0].device_kind.lower()
    except Exception:
        return 1
    return 2 if "v7" in kind else 1


def _kernel(x_ref, w1_ref, w2_ref, w3_ref, w4_ref, b_ref, o_ref):
    # x_ref: (TB, d_in) unpadded features; w1: (d_in, 128); w2..w4: (128, 128);
    # b_ref: (4, 128) packed biases, row 3 padded lanes = -1e30 (softmax mask).
    # Dropout(0.2) is identity at inference.
    h = x_ref[...]

    h = jnp.dot(h, w1_ref[...], preferred_element_type=jnp.float32) + b_ref[0:1, :]
    h = jnp.maximum(h, 0.0)

    h = jnp.dot(h, w2_ref[...], preferred_element_type=jnp.float32) + b_ref[1:2, :]
    h = jnp.maximum(h, 0.0)

    h = jnp.dot(h, w3_ref[...], preferred_element_type=jnp.float32) + b_ref[2:3, :]
    h = jnp.maximum(h, 0.0)

    logits = jnp.dot(h, w4_ref[...], preferred_element_type=jnp.float32) + b_ref[3:4, :]

    # Padded lanes carry -1e30 from the bias row, so they vanish in the softmax.
    m = jnp.max(logits, axis=-1, keepdims=True)
    e = jnp.exp(logits - m)
    s = jnp.sum(e, axis=-1, keepdims=True)
    o_ref[...] = e * pl.reciprocal(s)   # exact reciprocal: rows sum to 1


def policy_net_forward_batched(xs, params, *, block_b=1024, min_grid=None,
                               trim=True):
    """xs: (B, ...) where each row flattens to input_dim*input_dim elements.
    Returns (B, output_dim) probabilities; row b == PolicyNet.forward(xs[b])[0].
    With trim=False, returns the padded (B_pad, 128) slab (valid region is
    [:B, :output_dim]) and skips the extra trailing-slice HBM round trip."""
    dims = params["dims"]
    d_in, output_dim = dims[0], dims[-1]
    H_PAD = params["w"][1].shape[0]      # 128

    B = xs.shape[0]
    x = xs.reshape(B, -1).astype(jnp.float32)   # flatten once per batch
    assert x.shape[1] == d_in

    if min_grid is None:
        min_grid = _default_min_grid()

    # Tile/grid derivation: as few grid steps as possible (amortize the
    # ~0.35 us/step overhead), but at least `min_grid` steps for megacore.
    B_al = _round_up(max(B, SUBLANE), SUBLANE)
    n_tiles = max(min_grid, pl.cdiv(B_al, block_b))
    TB = _round_up(pl.cdiv(B_al, n_tiles), SUBLANE)
    B_pad = TB * n_tiles
    if B_pad != B:
        x = jnp.pad(x, ((0, B_pad - B), (0, 0)))   # batch (sublane) pad only

    out = pl.pallas_call(
        _kernel,
        out_shape=jax.ShapeDtypeStruct((B_pad, H_PAD), jnp.float32),
        grid_spec=pltpu.PrefetchScalarGridSpec(
            num_scalar_prefetch=0,
            grid=(n_tiles,),
            in_specs=[
                pl.BlockSpec((TB, d_in), lambda i: (i, 0)),       # x: tiled over B
                pl.BlockSpec((d_in, H_PAD), lambda i: (0, 0)),    # w1: resident
                pl.BlockSpec((H_PAD, H_PAD), lambda i: (0, 0)),   # w2: resident
                pl.BlockSpec((H_PAD, H_PAD), lambda i: (0, 0)),   # w3: resident
                pl.BlockSpec((H_PAD, H_PAD), lambda i: (0, 0)),   # w4: resident
                pl.BlockSpec((4, H_PAD), lambda i: (0, 0)),       # packed biases
            ],
            out_specs=pl.BlockSpec((TB, H_PAD), lambda i: (i, 0)),
        ),
        compiler_params=pltpu.CompilerParams(
            dimension_semantics=("parallel",)),
    )(x, params["w"][0], params["w"][1], params["w"][2], params["w"][3],
      params["b"])

    if trim:
        return out[:B, :output_dim]
    return out


def policy_net_forward(x, params):
    """Exact PolicyNet.forward semantics: one observation -> (1, output_dim).
    For real REINFORCE rollouts, batch observations and use the batched path."""
    return policy_net_forward_batched(x.reshape(1, -1), params)


def init_params(key, input_dim, output_dim):
    """torch.nn.Linear-style init, stored pre-transposed as (in, out). w1 keeps
    its true fan-in (input_dim^2); all output widths are zero-padded to 128
    lanes. Biases packed into one (4, 128) array; row 3's padded lanes hold
    -1e30 so padded logits vanish in the softmax without in-kernel masking."""
    d_in = input_dim * input_dim
    dims = [d_in, input_dim // 2, input_dim // 5, input_dim // 5, output_dim]
    assert max(dims[1:]) <= LANE, "hidden/output dims must fit one lane group"

    in_dims = [d_in, LANE, LANE, LANE]
    ws = []
    b_packed = jnp.zeros((4, LANE), jnp.float32).at[3, output_dim:].set(-1e30)
    for i in range(4):
        fan_in, fan_out = dims[i], dims[i + 1]
        key, kw, kb = jax.random.split(key, 3)
        bound = 1.0 / (fan_in ** 0.5)
        w = jax.random.uniform(kw, (fan_in, fan_out), jnp.float32, -bound, bound)
        b = jax.random.uniform(kb, (fan_out,), jnp.float32, -bound, bound)
        wp = jnp.zeros((in_dims[i], LANE), jnp.float32).at[:fan_in, :fan_out].set(w)
        ws.append(wp)
        b_packed = b_packed.at[i, :fan_out].set(b)
    return {"w": ws, "b": b_packed, "dims": dims}


def reference_forward(xs, params):
    """Pure-JAX reference on the unpadded slices of the same parameters."""
    dims = params["dims"]
    h = xs.reshape(xs.shape[0], -1).astype(jnp.float32)
    for i in range(4):
        w = params["w"][i][:dims[i], :dims[i + 1]]
        b = params["b"][i, :dims[i + 1]]
        h = h @ w + b
        if i < 3:
            h = jnp.maximum(h, 0.0)
    return jax.nn.softmax(h, axis=1)


if __name__ == "__main__":
    input_dim = 20      # -> hidden dims 10, 4, 4; flattened input 400
    output_dim = 4
    B = 256             # rollout batch of observations

    key = jax.random.PRNGKey(0)
    key, kx = jax.random.split(key)
    xs = jax.random.normal(kx, (B, input_dim, input_dim), dtype=jnp.float32)
    params = init_params(key, input_dim, output_dim)

    # Batched path: one pallas_call, minimal grid, weights DMA'd once.
    out_b = jax.block_until_ready(policy_net_forward_batched(xs, params))
    ref_b = reference_forward(xs, params)
    assert out_b.shape == (B, output_dim)
    assert jnp.allclose(jnp.sum(out_b, axis=1), 1.0, atol=1e-4)
    assert jnp.allclose(out_b, ref_b, atol=1e-3, rtol=1e-3)

    # Multi-tile path (forces grid >= 2; exercises the v7x two-TC sharding
    # branch and the per-tile index_map).
    out_t = jax.block_until_ready(
        policy_net_forward_batched(xs, params, block_b=64, min_grid=2))
    assert jnp.allclose(out_t, ref_b, atol=1e-3, rtol=1e-3)

    # Untrimmed slab path: consumer-side slicing (no extra HBM round trip).
    out_full = jax.block_until_ready(
        policy_net_forward_batched(xs, params, trim=False))
    assert jnp.allclose(out_full[:B, :output_dim], ref_b, atol=1e-3, rtol=1e-3)

    # Single-observation path (matches torch forward exactly: (1, output_dim)).
    out_1 = jax.block_until_ready(policy_net_forward(xs[0], params))
    assert out_1.shape == (1, output_dim)
    assert jnp.allclose(out_1, ref_b[0:1], atol=1e-3, rtol=1e-3)

    print("KERNEL_OK")
</pallas_src>

<mosaic_0001>
module attributes {stable_mosaic.version = 11 : i64} {
  func.func @_kernel(%arg0: i32, %arg1: memref<256x400xf32, #tpu.memory_space<vmem>>, %arg2: memref<400x128xf32, #tpu.memory_space<vmem>>, %arg3: memref<128x128xf32, #tpu.memory_space<vmem>>, %arg4: memref<128x128xf32, #tpu.memory_space<vmem>>, %arg5: memref<128x128xf32, #tpu.memory_space<vmem>>, %arg6: memref<4x128xf32, #tpu.memory_space<vmem>>, %arg7: memref<256x128xf32, #tpu.memory_space<vmem>>) attributes {dimension_semantics = [#tpu.dimension_semantics<parallel>], iteration_bounds = array<i64: 1>, scalar_prefetch = 0 : i64, scratch_operands = 0 : i64, tpu.core_type = #tpu.core_type<tc>, window_params = [{transform_indices = @transform_0, window_bounds = array<i64: 256, 400>}, {pipeline_mode = #tpu.pipeline_mode<synchronous>, transform_indices = @transform_1, window_bounds = array<i64: 400, 128>}, {pipeline_mode = #tpu.pipeline_mode<synchronous>, transform_indices = @transform_2, window_bounds = array<i64: 128, 128>}, {pipeline_mode = #tpu.pipeline_mode<synchronous>, transform_indices = @transform_3, window_bounds = array<i64: 128, 128>}, {pipeline_mode = #tpu.pipeline_mode<synchronous>, transform_indices = @transform_4, window_bounds = array<i64: 128, 128>}, {pipeline_mode = #tpu.pipeline_mode<synchronous>, transform_indices = @transform_5, window_bounds = array<i64: 4, 128>}, {transform_indices = @transform_6, window_bounds = array<i64: 256, 128>}]} {
    %c0 = arith.constant 0 : index
    %c0_0 = arith.constant 0 : index
    %0 = vector.load %arg1[%c0, %c0_0] : memref<256x400xf32, #tpu.memory_space<vmem>>, vector<256x400xf32>
    %c0_1 = arith.constant 0 : index
    %c0_2 = arith.constant 0 : index
    %1 = vector.load %arg2[%c0_1, %c0_2] : memref<400x128xf32, #tpu.memory_space<vmem>>, vector<400x128xf32>
    %cst = arith.constant dense<0.000000e+00> : vector<256x128xf32>
    %2 = tpu.matmul %0, %1, %cst {dimension_numbers = #tpu.dot_dimension_numbers<[1], [0], [0], [1], [0, 0, 1, 1], [], []>} : vector<256x400xf32>, vector<400x128xf32>, vector<256x128xf32> -> vector<256x128xf32>
    %c0_3 = arith.constant 0 : index
    %c0_4 = arith.constant 0 : index
    %3 = vector.load %arg6[%c0_3, %c0_4] : memref<4x128xf32, #tpu.memory_space<vmem>>, vector<1x128xf32>
    %4 = vector.broadcast %3 : vector<1x128xf32> to vector<256x128xf32>
    %5 = arith.addf %2, %4 : vector<256x128xf32>
    %cst_5 = arith.constant 0.000000e+00 : f32
    %6 = vector.broadcast %cst_5 : f32 to vector<256x128xf32>
    %7 = arith.maximumf %5, %6 : vector<256x128xf32>
    %c0_6 = arith.constant 0 : index
    %c0_7 = arith.constant 0 : index
    %8 = vector.load %arg3[%c0_6, %c0_7] : memref<128x128xf32, #tpu.memory_space<vmem>>, vector<128x128xf32>
    %cst_8 = arith.constant dense<0.000000e+00> : vector<256x128xf32>
    %9 = tpu.matmul %7, %8, %cst_8 {dimension_numbers = #tpu.dot_dimension_numbers<[1], [0], [0], [1], [0, 0, 1, 1], [], []>} : vector<256x128xf32>, vector<128x128xf32>, vector<256x128xf32> -> vector<256x128xf32>
    %c1 = arith.constant 1 : index
    %c0_9 = arith.constant 0 : index
    %10 = vector.load %arg6[%c1, %c0_9] : memref<4x128xf32, #tpu.memory_space<vmem>>, vector<1x128xf32>
    %11 = vector.broadcast %10 : vector<1x128xf32> to vector<256x128xf32>
    %12 = arith.addf %9, %11 : vector<256x128xf32>
    %cst_10 = arith.constant 0.000000e+00 : f32
    %13 = vector.broadcast %cst_10 : f32 to vector<256x128xf32>
    %14 = arith.maximumf %12, %13 : vector<256x128xf32>
    %c0_11 = arith.constant 0 : index
    %c0_12 = arith.constant 0 : index
    %15 = vector.load %arg4[%c0_11, %c0_12] : memref<128x128xf32, #tpu.memory_space<vmem>>, vector<128x128xf32>
    %cst_13 = arith.constant dense<0.000000e+00> : vector<256x128xf32>
    %16 = tpu.matmul %14, %15, %cst_13 {dimension_numbers = #tpu.dot_dimension_numbers<[1], [0], [0], [1], [0, 0, 1, 1], [], []>} : vector<256x128xf32>, vector<128x128xf32>, vector<256x128xf32> -> vector<256x128xf32>
    %c2 = arith.constant 2 : index
    %c0_14 = arith.constant 0 : index
    %17 = vector.load %arg6[%c2, %c0_14] : memref<4x128xf32, #tpu.memory_space<vmem>>, vector<1x128xf32>
    %18 = vector.broadcast %17 : vector<1x128xf32> to vector<256x128xf32>
    %19 = arith.addf %16, %18 : vector<256x128xf32>
    %cst_15 = arith.constant 0.000000e+00 : f32
    %20 = vector.broadcast %cst_15 : f32 to vector<256x128xf32>
    %21 = arith.maximumf %19, %20 : vector<256x128xf32>
    %c0_16 = arith.constant 0 : index
    %c0_17 = arith.constant 0 : index
    %22 = vector.load %arg5[%c0_16, %c0_17] : memref<128x128xf32, #tpu.memory_space<vmem>>, vector<128x128xf32>
    %cst_18 = arith.constant dense<0.000000e+00> : vector<256x128xf32>
    %23 = tpu.matmul %21, %22, %cst_18 {dimension_numbers = #tpu.dot_dimension_numbers<[1], [0], [0], [1], [0, 0, 1, 1], [], []>} : vector<256x128xf32>, vector<128x128xf32>, vector<256x128xf32> -> vector<256x128xf32>
    %c3 = arith.constant 3 : index
    %c0_19 = arith.constant 0 : index
    %24 = vector.load %arg6[%c3, %c0_19] : memref<4x128xf32, #tpu.memory_space<vmem>>, vector<1x128xf32>
    %25 = vector.broadcast %24 : vector<1x128xf32> to vector<256x128xf32>
    %26 = arith.addf %23, %25 : vector<256x128xf32>
    %cst_20 = arith.constant dense<0xFF800000> : vector<256xf32>
    %27 = vector.multi_reduction <maximumf>, %26, %cst_20 [1] : vector<256x128xf32> to vector<256xf32>
    %28 = vector.shape_cast %27 : vector<256xf32> to vector<256x1xf32>
    %29 = vector.broadcast %28 : vector<256x1xf32> to vector<256x128xf32>
    %30 = arith.subf %26, %29 : vector<256x128xf32>
    %31 = math.exp %30 : vector<256x128xf32>
    %cst_21 = arith.constant dense<0.000000e+00> : vector<256xf32>
    %32 = vector.multi_reduction <add>, %31, %cst_21 [1] : vector<256x128xf32> to vector<256xf32>
    %33 = vector.shape_cast %32 : vector<256xf32> to vector<256x1xf32>
    %34 = tpu.reciprocal %33 : vector<256x1xf32> -> vector<256x1xf32>
    %35 = vector.broadcast %34 : vector<256x1xf32> to vector<256x128xf32>
    %36 = arith.mulf %31, %35 : vector<256x128xf32>
    %c0_22 = arith.constant 0 : index
    %c0_23 = arith.constant 0 : index
    %37 = vector.load %arg7[%c0_22, %c0_23] : memref<256x128xf32, #tpu.memory_space<vmem>>, vector<256x128xf32>
    tpu.vector_store %arg7[%c0_22, %c0_23], %36 {strides = array<i32>} : memref<256x128xf32, #tpu.memory_space<vmem>>, vector<256x128xf32>,
    return
  }
  func.func @transform_0(%arg0: i32) -> (i32, i32) {
    %c0_i32 = arith.constant 0 : i32
    %c0_i32_0 = arith.constant 0 : i32
    return %arg0, %c0_i32 : i32, i32
  }
  func.func @transform_1(%arg0: i32) -> (i32, i32) {
    %c0_i32 = arith.constant 0 : i32
    %c0_i32_0 = arith.constant 0 : i32
    %c0_i32_1 = arith.constant 0 : i32
    return %c0_i32, %c0_i32_0 : i32, i32
  }
  func.func @transform_2(%arg0: i32) -> (i32, i32) {
    %c0_i32 = arith.constant 0 : i32
    %c0_i32_0 = arith.constant 0 : i32
    %c0_i32_1 = arith.constant 0 : i32
    return %c0_i32, %c0_i32_0 : i32, i32
  }
  func.func @transform_3(%arg0: i32) -> (i32, i32) {
    %c0_i32 = arith.constant 0 : i32
    %c0_i32_0 = arith.constant 0 : i32
    %c0_i32_1 = arith.constant 0 : i32
    return %c0_i32, %c0_i32_0 : i32, i32
  }
  func.func @transform_4(%arg0: i32) -> (i32, i32) {
    %c0_i32 = arith.constant 0 : i32
    %c0_i32_0 = arith.constant 0 : i32
    %c0_i32_1 = arith.constant 0 : i32
    return %c0_i32, %c0_i32_0 : i32, i32
  }
  func.func @transform_5(%arg0: i32) -> (i32, i32) {
    %c0_i32 = arith.constant 0 : i32
    %c0_i32_0 = arith.constant 0 : i32
    %c0_i32_1 = arith.constant 0 : i32
    return %c0_i32, %c0_i32_0 : i32, i32
  }
  func.func @transform_6(%arg0: i32) -> (i32, i32) {
    %c0_i32 = arith.constant 0 : i32
    %c0_i32_0 = arith.constant 0 : i32
    return %arg0, %c0_i32 : i32, i32
  }
}

</mosaic_0001>

<llo_original>
// kernel: tpu_custom_call.1
$region0: #{tpu_custom_call.1}
  #allocation0 [shape = 'u32[]', space=smem, size = 0x4, offset = 0x4, fixed_abs, tag = 'smem constant byte address 0x4 - core index']
  #allocation1 [shape = 'u32[144,128]{1,0:T(1,128)}', space=vmem, size = 0x12000, scoped, tag = 'internal scratch']
  %s0 = inlined_call_operand.vmem [shape: f32[256,400], index: 0, kind: input, shape index: {}]
  %s1 = inlined_call_operand.vmem [shape: f32[400,128], index: 1, kind: input, shape index: {}]
  %s2 = inlined_call_operand.vmem [shape: f32[128,128], index: 2, kind: input, shape index: {}]
  %s3 = inlined_call_operand.vmem [shape: f32[128,128], index: 3, kind: input, shape index: {}]
  %s4 = inlined_call_operand.vmem [shape: f32[128,128], index: 4, kind: input, shape index: {}]
  %s5 = inlined_call_operand.vmem [shape: f32[4,128], index: 5, kind: input, shape index: {}]
  %s6 = inlined_call_operand.hbm [shape: f32[256,128], index: 6, kind: output, shape index: {}]
  %s7 = sld [smem:[#allocation0]]
  $region34: #{tpu_custom_call.1} parent=0
    _
  %s9 = ssub.s32 1, %s7
  %s10 = scalar_select 0, %s9, %s7
  $region1: #{tpu_custom_call.1} parent=0
    #allocation2 [shape = 'u8[131072]{0}', space=vmem, size = 0x20000, scoped, tag = 'output window, operand 0, single buffered']
    #allocation3 [shape = 's32[1]{0}', space=sflag, size = 0x4, scoped, tag = 'scoped memory for tpu_custom_call.1']
    %11 = vsyncpa [#allocation3], 0
    // Predicated region
    $region2: #{tpu_custom_call.1} parent=1 // pred_check
      _
    $region3: #{tpu_custom_call.1} parent=1 // pred_check_branch
      %13 = sbr.rel (0) target = $region5
    $region4: #{tpu_custom_call.1} parent=1 // pred_region
      _
    $region5: #{tpu_custom_call.1} parent=1 // pred_fallthru
      _
    // Predicated region
    $region6: #{tpu_custom_call.1} parent=1 // pred_check
      _
    $region7: #{tpu_custom_call.1} parent=1 // pred_check_branch
      %15 = sbr.rel (0) target = $region9
    $region8: #{tpu_custom_call.1} parent=1 // pred_region
      _
    $region9: #{tpu_custom_call.1} parent=1 // pred_fallthru
      _
    // Predicated region
    $region10: #{tpu_custom_call.1} parent=1 // pred_check
      _
    $region11: #{tpu_custom_call.1} parent=1 // pred_check_branch
      %17 = sbr.rel (0) target = $region13
    $region12: #{tpu_custom_call.1} parent=1 // pred_region
      _
    $region13: #{tpu_custom_call.1} parent=1 // pred_fallthru
      _
    // Predicated region
    $region14: #{tpu_custom_call.1} parent=1 // pred_check
      _
    $region15: #{tpu_custom_call.1} parent=1 // pred_check_branch
      %19 = sbr.rel (0) target = $region17
    $region16: #{tpu_custom_call.1} parent=1 // pred_region
      _
    $region17: #{tpu_custom_call.1} parent=1 // pred_fallthru
      _
    // Predicated region
    $region18: #{tpu_custom_call.1} parent=1 // pred_check
      _
    $region19: #{tpu_custom_call.1} parent=1 // pred_check_branch
      %21 = sbr.rel (0) target = $region21
    $region20: #{tpu_custom_call.1} parent=1 // pred_region
      _
    $region21: #{tpu_custom_call.1} parent=1 // pred_fallthru
      _
    // Predicated region
    $region22: #{tpu_custom_call.1} parent=1 // pred_check
      _
    $region23: #{tpu_custom_call.1} parent=1 // pred_check_branch
      %23 = sbr.rel (0) target = $region25
    $region24: #{tpu_custom_call.1} parent=1 // pred_region
      _
    $region25: #{tpu_custom_call.1} parent=1 // pred_fallthru
      _
    %v24 = vld [vmem:[%s0] sm:$0xff]
    %v25 = vld [vmem:[%s0 + $0x8] sm:$0xff]
    %v26 = vld [vmem:[%s0 + $0x10] sm:$0xff]
    %v27 = vld [vmem:[%s0 + $0x18] sm:$0xff]
    %v28 = vld [vmem:[%s0 + $0x20] sm:$0xff]
    %v29 = vld [vmem:[%s0 + $0x28] sm:$0xff]
    %v30 = vld [vmem:[%s0 + $0x30] sm:$0xff]
    %v31 = vld [vmem:[%s0 + $0x38] sm:$0xff]
    %v32 = vld [vmem:[%s0 + $0x40] sm:$0xff]
    %v33 = vld [vmem:[%s0 + $0x48] sm:$0xff]
    %v34 = vld [vmem:[%s0 + $0x50] sm:$0xff]
    %v35 = vld [vmem:[%s0 + $0x58] sm:$0xff]
    %v36 = vld [vmem:[%s0 + $0x60] sm:$0xff]
    %v37 = vld [vmem:[%s0 + $0x68] sm:$0xff]
    %v38 = vld [vmem:[%s0 + $0x70] sm:$0xff]
    %v39 = vld [vmem:[%s0 + $0x78] sm:$0xff]
    %v40 = vld [vmem:[%s0 + $0x80] sm:$0xff]
    %v41 = vld [vmem:[%s0 + $0x88] sm:$0xff]
    %v42 = vld [vmem:[%s0 + $0x90] sm:$0xff]
    %v43 = vld [vmem:[%s0 + $0x98] sm:$0xff]
    %v44 = vld [vmem:[%s0 + $0xa0] sm:$0xff]
    %v45 = vld [vmem:[%s0 + $0xa8] sm:$0xff]
    %v46 = vld [vmem:[%s0 + $0xb0] sm:$0xff]
    %v47 = vld [vmem:[%s0 + $0xb8] sm:$0xff]
    %v48 = vld [vmem:[%s0 + $0xc0] sm:$0xff]
    %v49 = vld [vmem:[%s0 + $0xc8] sm:$0xff]
    %v50 = vld [vmem:[%s0 + $0xd0] sm:$0xff]
    %v51 = vld [vmem:[%s0 + $0xd8] sm:$0xff]
    %v52 = vld [vmem:[%s0 + $0xe0] sm:$0xff]
    %v53 = vld [vmem:[%s0 + $0xe8] sm:$0xff]
    %v54 = vld [vmem:[%s0 + $0xf0] sm:$0xff]
    %v55 = vld [vmem:[%s0 + $0xf8] sm:$0xff]
    %v56 = vld [vmem:[%s0 + $0x100] sm:$0xff]
    %v57 = vld [vmem:[%s0 + $0x108] sm:$0xff]
    %v58 = vld [vmem:[%s0 + $0x110] sm:$0xff]
    %v59 = vld [vmem:[%s0 + $0x118] sm:$0xff]
    %v60 = vld [vmem:[%s0 + $0x120] sm:$0xff]
    %v61 = vld [vmem:[%s0 + $0x128] sm:$0xff]
    %v62 = vld [vmem:[%s0 + $0x130] sm:$0xff]
    %v63 = vld [vmem:[%s0 + $0x138] sm:$0xff]
    %v64 = vld [vmem:[%s0 + $0x140] sm:$0xff]
    %v65 = vld [vmem:[%s0 + $0x148] sm:$0xff]
    %v66 = vld [vmem:[%s0 + $0x150] sm:$0xff]
    %v67 = vld [vmem:[%s0 + $0x158] sm:$0xff]
    %v68 = vld [vmem:[%s0 + $0x160] sm:$0xff]
    %v69 = vld [vmem:[%s0 + $0x168] sm:$0xff]
    %v70 = vld [vmem:[%s0 + $0x170] sm:$0xff]
    %v71 = vld [vmem:[%s0 + $0x178] sm:$0xff]
    %v72 = vld [vmem:[%s0 + $0x180] sm:$0xff]
    %v73 = vld [vmem:[%s0 + $0x188] sm:$0xff]
    %v74 = vld [vmem:[%s0 + $0x190] sm:$0xff]
    %v75 = vld [vmem:[%s0 + $0x198] sm:$0xff]
    %v76 = vld [vmem:[%s0 + $0x1a0] sm:$0xff]
    %v77 = vld [vmem:[%s0 + $0x1a8] sm:$0xff]
    %v78 = vld [vmem:[%s0 + $0x1b0] sm:$0xff]
    %v79 = vld [vmem:[%s0 + $0x1b8] sm:$0xff]
    %v80 = vld [vmem:[%s0 + $0x1c0] sm:$0xff]
    %v81 = vld [vmem:[%s0 + $0x1c8] sm:$0xff]
    %v82 = vld [vmem:[%s0 + $0x1d0] sm:$0xff]
    %v83 = vld [vmem:[%s0 + $0x1d8] sm:$0xff]
    %v84 = vld [vmem:[%s0 + $0x1e0] sm:$0xff]
    %v85 = vld [vmem:[%s0 + $0x1e8] sm:$0xff]
    %v86 = vld [vmem:[%s0 + $0x1f0] sm:$0xff]
    %v87 = vld [vmem:[%s0 + $0x1f8] sm:$0xff]
    %v88 = vld [vmem:[%s0 + $0x200] sm:$0xff]
    %v89 = vld [vmem:[%s0 + $0x208] sm:$0xff]
    %v90 = vld [vmem:[%s0 + $0x210] sm:$0xff]
    %v91 = vld [vmem:[%s0 + $0x218] sm:$0xff]
    %v92 = vld [vmem:[%s0 + $0x220] sm:$0xff]
    %v93 = vld [vmem:[%s0 + $0x228] sm:$0xff]
    %v94 = vld [vmem:[%s0 + $0x230] sm:$0xff]
    %v95 = vld [vmem:[%s0 + $0x238] sm:$0xff]
    %v96 = vld [vmem:[%s0 + $0x240] sm:$0xff]
    %v97 = vld [vmem:[%s0 + $0x248] sm:$0xff]
    %v98 = vld [vmem:[%s0 + $0x250] sm:$0xff]
    %v99 = vld [vmem:[%s0 + $0x258] sm:$0xff]
    %v100 = vld [vmem:[%s0 + $0x260] sm:$0xff]
    %v101 = vld [vmem:[%s0 + $0x268] sm:$0xff]
    %v102 = vld [vmem:[%s0 + $0x270] sm:$0xff]
    %v103 = vld [vmem:[%s0 + $0x278] sm:$0xff]
    %v104 = vld [vmem:[%s0 + $0x280] sm:$0xff]
    %v105 = vld [vmem:[%s0 + $0x288] sm:$0xff]
    %v106 = vld [vmem:[%s0 + $0x290] sm:$0xff]
    %v107 = vld [vmem:[%s0 + $0x298] sm:$0xff]
    %v108 = vld [vmem:[%s0 + $0x2a0] sm:$0xff]
    %v109 = vld [vmem:[%s0 + $0x2a8] sm:$0xff]
    %v110 = vld [vmem:[%s0 + $0x2b0] sm:$0xff]
    %v111 = vld [vmem:[%s0 + $0x2b8] sm:$0xff]
    %v112 = vld [vmem:[%s0 + $0x2c0] sm:$0xff]
    %v113 = vld [vmem:[%s0 + $0x2c8] sm:$0xff]
    %v114 = vld [vmem:[%s0 + $0x2d0] sm:$0xff]
    %v115 = vld [vmem:[%s0 + $0x2d8] sm:$0xff]
    %v116 = vld [vmem:[%s0 + $0x2e0] sm:$0xff]
    %v117 = vld [vmem:[%s0 + $0x2e8] sm:$0xff]
    %v118 = vld [vmem:[%s0 + $0x2f0] sm:$0xff]
    %v119 = vld [vmem:[%s0 + $0x2f8] sm:$0xff]
    %v120 = vld [vmem:[%s0 + $0x300] sm:$0xff]
    %v121 = vld [vmem:[%s0 + $0x308] sm:$0xff]
    %v122 = vld [vmem:[%s0 + $0x310] sm:$0xff]
    %v123 = vld [vmem:[%s0 + $0x318] sm:$0xff]
    %v124 = vld [vmem:[%s0 + $0x320] sm:$0xff]
    %v125 = vld [vmem:[%s0 + $0x328] sm:$0xff]
    %v126 = vld [vmem:[%s0 + $0x330] sm:$0xff]
    %v127 = vld [vmem:[%s0 + $0x338] sm:$0xff]
    %v128 = vld [vmem:[%s0 + $0x340] sm:$0xff]
    %v129 = vld [vmem:[%s0 + $0x348] sm:$0xff]
    %v130 = vld [vmem:[%s0 + $0x350] sm:$0xff]
    %v131 = vld [vmem:[%s0 + $0x358] sm:$0xff]
    %v132 = vld [vmem:[%s0 + $0x360] sm:$0xff]
    %v133 = vld [vmem:[%s0 + $0x368] sm:$0xff]
    %v134 = vld [vmem:[%s0 + $0x370] sm:$0xff]
    %v135 = vld [vmem:[%s0 + $0x378] sm:$0xff]
    %v136 = vld [vmem:[%s0 + $0x380] sm:$0xff]
    %v137 = vld [vmem:[%s0 + $0x388] sm:$0xff]
    %v138 = vld [vmem:[%s0 + $0x390] sm:$0xff]
    %v139 = vld [vmem:[%s0 + $0x398] sm:$0xff]
    %v140 = vld [vmem:[%s0 + $0x3a0] sm:$0xff]
    %v141 = vld [vmem:[%s0 + $0x3a8] sm:$0xff]
    %v142 = vld [vmem:[%s0 + $0x3b0] sm:$0xff]
    %v143 = vld [vmem:[%s0 + $0x3b8] sm:$0xff]
    %v144 = vld [vmem:[%s0 + $0x3c0] sm:$0xff]
    %v145 = vld [vmem:[%s0 + $0x3c8] sm:$0xff]
    %v146 = vld [vmem:[%s0 + $0x3d0] sm:$0xff]
    %v147 = vld [vmem:[%s0 + $0x3d8] sm:$0xff]
    %v148 = vld [vmem:[%s0 + $0x3e0] sm:$0xff]
    %v149 = vld [vmem:[%s0 + $0x3e8] sm:$0xff]
    %v150 = vld [vmem:[%s0 + $0x3f0] sm:$0xff]
    %v151 = vld [vmem:[%s0 + $0x3f8] sm:$0xff]
    %v152 = vld [vmem:[%s1] sm:$0xff]
    %v153 = vld [vmem:[%s1 + $0x8] sm:$0xff]
    %v154 = vld [vmem:[%s1 + $0x10] sm:$0xff]
    %v155 = vld [vmem:[%s1 + $0x18] sm:$0xff]
    %v156 = vld [vmem:[%s1 + $0x20] sm:$0xff]
    %v157 = vld [vmem:[%s1 + $0x28] sm:$0xff]
    %v158 = vld [vmem:[%s1 + $0x30] sm:$0xff]
    %v159 = vld [vmem:[%s1 + $0x38] sm:$0xff]
    %v160 = vld [vmem:[%s1 + $0x40] sm:$0xff]
    %v161 = vld [vmem:[%s1 + $0x48] sm:$0xff]
    %v162 = vld [vmem:[%s1 + $0x50] sm:$0xff]
    %v163 = vld [vmem:[%s1 + $0x58] sm:$0xff]
    %v164 = vld [vmem:[%s1 + $0x60] sm:$0xff]
    %v165 = vld [vmem:[%s1 + $0x68] sm:$0xff]
    %v166 = vld [vmem:[%s1 + $0x70] sm:$0xff]
    %v167 = vld [vmem:[%s1 + $0x78] sm:$0xff]
    %v168 = vld [vmem:[%s1 + $0x80] sm:$0xff]
    %v169 = vld [vmem:[%s1 + $0x88] sm:$0xff]
    %v170 = vld [vmem:[%s1 + $0x90] sm:$0xff]
    %v171 = vld [vmem:[%s1 + $0x98] sm:$0xff]
    %v172 = vld [vmem:[%s1 + $0xa0] sm:$0xff]
    %v173 = vld [vmem:[%s1 + $0xa8] sm:$0xff]
    %v174 = vld [vmem:[%s1 + $0xb0] sm:$0xff]
    %v175 = vld [vmem:[%s1 + $0xb8] sm:$0xff]
    %v176 = vld [vmem:[%s1 + $0xc0] sm:$0xff]
    %v177 = vld [vmem:[%s1 + $0xc8] sm:$0xff]
    %v178 = vld [vmem:[%s1 + $0xd0] sm:$0xff]
    %v179 = vld [vmem:[%s1 + $0xd8] sm:$0xff]
    %v180 = vld [vmem:[%s1 + $0xe0] sm:$0xff]
    %v181 = vld [vmem:[%s1 + $0xe8] sm:$0xff]
    %v182 = vld [vmem:[%s1 + $0xf0] sm:$0xff]
    %v183 = vld [vmem:[%s1 + $0xf8] sm:$0xff]
    %v184 = vld [vmem:[%s1 + $0x100] sm:$0xff]
    %v185 = vld [vmem:[%s1 + $0x108] sm:$0xff]
    %v186 = vld [vmem:[%s1 + $0x110] sm:$0xff]
    %v187 = vld [vmem:[%s1 + $0x118] sm:$0xff]
    %v188 = vld [vmem:[%s1 + $0x120] sm:$0xff]
    %v189 = vld [vmem:[%s1 + $0x128] sm:$0xff]
    %v190 = vld [vmem:[%s1 + $0x130] sm:$0xff]
    %v191 = vld [vmem:[%s1 + $0x138] sm:$0xff]
    %v192 = vld [vmem:[%s1 + $0x140] sm:$0xff]
    %v193 = vld [vmem:[%s1 + $0x148] sm:$0xff]
    %v194 = vld [vmem:[%s1 + $0x150] sm:$0xff]
    %v195 = vld [vmem:[%s1 + $0x158] sm:$0xff]
    %v196 = vld [vmem:[%s1 + $0x160] sm:$0xff]
    %v197 = vld [vmem:[%s1 + $0x168] sm:$0xff]
    %v198 = vld [vmem:[%s1 + $0x170] sm:$0xff]
    %v199 = vld [vmem:[%s1 + $0x178] sm:$0xff]
    %v200 = vld [vmem:[%s1 + $0x180] sm:$0xff]
    %v201 = vld [vmem:[%s1 + $0x188] sm:$0xff]
    %v202 = vld [vmem:[%s5] sm:$0x1]
    %v203 = vlaneseq
    %v204 = vshrl.u32 %v203, 7
    %v205 = vsub.s32 0, %v204
    %v206 = vrot.slane %v202, %v205
    %vm207 = vcmask 130048
    %v209 = vsel %vm207, %v27, 0
    %v212 = vsel %vm207, %v31, 0
    %v215 = vsel %vm207, %v35, 0
    %v218 = vsel %vm207, %v39, 0
    %v221 = vsel %vm207, %v43, 0
    %v224 = vsel %vm207, %v47, 0
    %v227 = vsel %vm207, %v51, 0
    %v230 = vsel %vm207, %v55, 0
    %v233 = vsel %vm207, %v59, 0
    %v236 = vsel %vm207, %v63, 0
    %v239 = vsel %vm207, %v67, 0
    %v242 = vsel %vm207, %v71, 0
    %v245 = vsel %vm207, %v75, 0
    %v248 = vsel %vm207, %v79, 0
    %v251 = vsel %vm207, %v83, 0
    %v254 = vsel %vm207, %v87, 0
    %v257 = vsel %vm207, %v91, 0
    %v260 = vsel %vm207, %v95, 0
    %v263 = vsel %vm207, %v99, 0
    %v266 = vsel %vm207, %v103, 0
    %v269 = vsel %vm207, %v107, 0
    %v272 = vsel %vm207, %v111, 0
    %v275 = vsel %vm207, %v115, 0
    %v278 = vsel %vm207, %v119, 0
    %v281 = vsel %vm207, %v123, 0
    %v284 = vsel %vm207, %v127, 0
    %v287 = vsel %vm207, %v131, 0
    %v290 = vsel %vm207, %v135, 0
    %v293 = vsel %vm207, %v139, 0
    %v296 = vsel %vm207, %v143, 0
    %v299 = vsel %vm207, %v147, 0
    %v302 = vsel %vm207, %v151, 0
    %304 = vmatprep.subr.mxu0 0.0
    %305 = vmatpush1.msra.mxu0 %v152
    %306 = vmatprep.subr.mxu0 0.0
    %307 = vmatpush1.msra.mxu0 %v153
    %308 = vmatprep.subr.mxu0 0.0
    %309 = vmatpush1.msra.mxu0 %v154
    %310 = vmatprep.subr.mxu0 0.0
    %311 = vmatpush1.msra.mxu0 %v155
    %312 = vmatprep.subr.mxu0 0.0
    %313 = vmatpush1.msra.mxu0 %v156
    %314 = vmatprep.subr.mxu0 0.0
    %315 = vmatpush1.msra.mxu0 %v157
    %316 = vmatprep.subr.mxu0 0.0
    %317 = vmatpush1.msra.mxu0 %v158
    %318 = vmatprep.subr.mxu0 0.0
    %319 = vmatpush1.msra.mxu0 %v159
    %320 = vmatprep.subr.mxu0 0.0
    %321 = vmatpush1.msra.mxu0 %v160
    %322 = vmatprep.subr.mxu0 0.0
    %323 = vmatpush1.msra.mxu0 %v161
    %324 = vmatprep.subr.mxu0 0.0
    %325 = vmatpush1.msra.mxu0 %v162
    %326 = vmatprep.subr.mxu0 0.0
    %327 = vmatpush1.msra.mxu0 %v163
    %328 = vmatprep.subr.mxu0 0.0
    %329 = vmatpush1.msra.mxu0 %v164
    %330 = vmatprep.subr.mxu0 0.0
    %331 = vmatpush1.msra.mxu0 %v165
    %332 = vmatprep.subr.mxu0 0.0
    %333 = vmatpush1.msra.mxu0 %v166
    %334 = vmatprep.subr.mxu0 0.0
    %335 = vmatpush1.msra.mxu0 %v167
    %336 = vmatprep.subr.mxu0 0.0
    %337 = vmatpush1.msra.mxu0 %v168
    %338 = vmatprep.subr.mxu0 0.0
    %339 = vmatpush1.msra.mxu0 %v169
    %340 = vmatprep.subr.mxu0 0.0
    %341 = vmatpush1.msra.mxu0 %v170
    %342 = vmatprep.subr.mxu0 0.0
    %343 = vmatpush1.msra.mxu0 %v171
    %344 = vmatprep.subr.mxu0 0.0
    %345 = vmatpush1.msra.mxu0 %v172
    %346 = vmatprep.subr.mxu0 0.0
    %347 = vmatpush1.msra.mxu0 %v173
    %348 = vmatprep.subr.mxu0 0.0
    %349 = vmatpush1.msra.mxu0 %v174
    %350 = vmatprep.subr.mxu0 0.0
    %351 = vmatpush1.msra.mxu0 %v175
    %352 = vmatprep.subr.mxu0 0.0
    %353 = vmatpush1.msra.mxu0 %v176
    %354 = vmatprep.subr.mxu0 0.0
    %355 = vmatpush1.msra.mxu0 %v177
    %356 = vmatprep.subr.mxu0 0.0
    %357 = vmatpush1.msra.mxu0 %v178
    %358 = vmatprep.subr.mxu0 0.0
    %359 = vmatpush1.msra.mxu0 %v179
    %360 = vmatprep.subr.mxu0 0.0
    %361 = vmatpush1.msra.mxu0 %v180
    %362 = vmatprep.subr.mxu0 0.0
    %363 = vmatpush1.msra.mxu0 %v181
    %364 = vmatprep.subr.mxu0 0.0
    %365 = vmatpush1.msra.mxu0 %v182
    %366 = vmatprep.subr.mxu0 0.0
    %367 = vmatpush1.msra.mxu0 %v183
    %368 = vmatprep.mubr.f32.mxu0 %v25
    %369 = vmatmul.mubr.f32.gmra.mrb[0].mxu0 %v24
    %v370 = vpop.f32.mrb[0].mxu0
    %v371 = vadd.f32 %v206, %v370
    %v372 = vpop.f32.mrb[0].mxu0
    %373 = vmatprep.mubr.f32.mxu0 %v29
    %374 = vmatmul.mubr.f32.gmra.mrb[0].mxu0 %v28
    %v375 = vpop.f32.mrb[0].mxu0
    %v376 = vadd.f32 %v206, %v375
    %v377 = vpop.f32.mrb[0].mxu0
    %378 = vmatprep.mubr.f32.mxu0 %v33
    %379 = vmatmul.mubr.f32.gmra.mrb[0].mxu0 %v32
    %v380 = vpop.f32.mrb[0].mxu0
    %v381 = vadd.f32 %v206, %v380
    %v382 = vpop.f32.mrb[0].mxu0
    %383 = vmatprep.mubr.f32.mxu0 %v37
    %384 = vmatmul.mubr.f32.gmra.mrb[0].mxu0 %v36
    %v385 = vpop.f32.mrb[0].mxu0
    %v386 = vadd.f32 %v206, %v385
    %v387 = vpop.f32.mrb[0].mxu0
    %388 = vmatprep.mubr.f32.mxu0 %v41
    %389 = vmatmul.mubr.f32.gmra.mrb[0].mxu0 %v40
    %v390 = vpop.f32.mrb[0].mxu0
    %v391 = vadd.f32 %v206, %v390
    %v392 = vpop.f32.mrb[0].mxu0
    %393 = vmatprep.mubr.f32.mxu0 %v45
    %394 = vmatmul.mubr.f32.gmra.mrb[0].mxu0 %v44
    %v395 = vpop.f32.mrb[0].mxu0
    %v396 = vadd.f32 %v206, %v395
    %v397 = vpop.f32.mrb[0].mxu0
    %398 = vmatprep.mubr.f32.mxu0 %v49
    %399 = vmatmul.mubr.f32.gmra.mrb[0].mxu0 %v48
    %v400 = vpop.f32.mrb[0].mxu0
    %v401 = vadd.f32 %v206, %v400
    %v402 = vpop.f32.mrb[0].mxu0
    %403 = vmatprep.mubr.f32.mxu0 %v53
    %404 = vmatmul.mubr.f32.gmra.mrb[0].mxu0 %v52
    %v405 = vpop.f32.mrb[0].mxu0
    %v406 = vadd.f32 %v206, %v405
    %v407 = vpop.f32.mrb[0].mxu0
    %408 = vmatprep.mubr.f32.mxu0 %v57
    %409 = vmatmul.mubr.f32.gmra.mrb[0].mxu0 %v56
    %v410 = vpop.f32.mrb[0].mxu0
    %v411 = vadd.f32 %v206, %v410
    %v412 = vpop.f32.mrb[0].mxu0
    %413 = vmatprep.mubr.f32.mxu0 %v61
    %414 = vmatmul.mubr.f32.gmra.mrb[0].mxu0 %v60
    %v415 = vpop.f32.mrb[0].mxu0
    %v416 = vadd.f32 %v206, %v415
    %v417 = vpop.f32.mrb[0].mxu0
    %418 = vmatprep.mubr.f32.mxu0 %v65
    %419 = vmatmul.mubr.f32.gmra.mrb[0].mxu0 %v64
    %v420 = vpop.f32.mrb[0].mxu0
    %v421 = vadd.f32 %v206, %v420
    %v422 = vpop.f32.mrb[0].mxu0
    %423 = vmatprep.mubr.f32.mxu0 %v69
    %424 = vmatmul.mubr.f32.gmra.mrb[0].mxu0 %v68
    %v425 = vpop.f32.mrb[0].mxu0
    %v426 = vadd.f32 %v206, %v425
    %v427 = vpop.f32.mrb[0].mxu0
    %428 = vmatprep.mubr.f32.mxu0 %v73
    %429 = vmatmul.mubr.f32.gmra.mrb[0].mxu0 %v72
    %v430 = vpop.f32.mrb[0].mxu0
    %v431 = vadd.f32 %v206, %v430
    %v432 = vpop.f32.mrb[0].mxu0
    %433 = vmatprep.mubr.f32.mxu0 %v77
    %434 = vmatmul.mubr.f32.gmra.mrb[0].mxu0 %v76
    %v435 = vpop.f32.mrb[0].mxu0
    %v436 = vadd.f32 %v206, %v435
    %v437 = vpop.f32.mrb[0].mxu0
    %438 = vmatprep.mubr.f32.mxu0 %v81
    %439 = vmatmul.mubr.f32.gmra.mrb[0].mxu0 %v80
    %v440 = vpop.f32.mrb[0].mxu0
    %v441 = vadd.f32 %v206, %v440
    %v442 = vpop.f32.mrb[0].mxu0
    %443 = vmatprep.mubr.f32.mxu0 %v85
    %444 = vmatmul.mubr.f32.gmra.mrb[0].mxu0 %v84
    %v445 = vpop.f32.mrb[0].mxu0
    %v446 = vadd.f32 %v206, %v445
    %v447 = vpop.f32.mrb[0].mxu0
    %448 = vmatprep.mubr.f32.mxu0 %v89
    %449 = vmatmul.mubr.f32.gmra.mrb[0].mxu0 %v88
    %v450 = vpop.f32.mrb[0].mxu0
    %v451 = vadd.f32 %v206, %v450
    %v452 = vpop.f32.mrb[0].mxu0
    %453 = vmatprep.mubr.f32.mxu0 %v93
    %454 = vmatmul.mubr.f32.gmra.mrb[0].mxu0 %v92
    %v455 = vpop.f32.mrb[0].mxu0
    %v456 = vadd.f32 %v206, %v455
    %v457 = vpop.f32.mrb[0].mxu0
    %458 = vmatprep.mubr.f32.mxu0 %v97
    %459 = vmatmul.mubr.f32.gmra.mrb[0].mxu0 %v96
    %v460 = vpop.f32.mrb[0].mxu0
    %v461 = vadd.f32 %v206, %v460
    %v462 = vpop.f32.mrb[0].mxu0
    %463 = vmatprep.mubr.f32.mxu0 %v101
    %464 = vmatmul.mubr.f32.gmra.mrb[0].mxu0 %v100
    %v465 = vpop.f32.mrb[0].mxu0
    %v466 = vadd.f32 %v206, %v465
    %v467 = vpop.f32.mrb[0].mxu0
    %468 = vmatprep.mubr.f32.mxu0 %v105
    %469 = vmatmul.mubr.f32.gmra.mrb[0].mxu0 %v104
    %v470 = vpop.f32.mrb[0].mxu0
    %v471 = vadd.f32 %v206, %v470
    %v472 = vpop.f32.mrb[0].mxu0
    %473 = vmatprep.mubr.f32.mxu0 %v109
    %474 = vmatmul.mubr.f32.gmra.mrb[0].mxu0 %v108
    %v475 = vpop.f32.mrb[0].mxu0
    %v476 = vadd.f32 %v206, %v475
    %v477 = vpop.f32.mrb[0].mxu0
    %478 = vmatprep.mubr.f32.mxu0 %v113
    %479 = vmatmul.mubr.f32.gmra.mrb[0].mxu0 %v112
    %v480 = vpop.f32.mrb[0].mxu0
    %v481 = vadd.f32 %v206, %v480
    %v482 = vpop.f32.mrb[0].mxu0
    %483 = vmatprep.mubr.f32.mxu0 %v117
    %484 = vmatmul.mubr.f32.gmra.mrb[0].mxu0 %v116
    %v485 = vpop.f32.mrb[0].mxu0
    %v486 = vadd.f32 %v206, %v485
    %v487 = vpop.f32.mrb[0].mxu0
    %488 = vmatprep.mubr.f32.mxu0 %v121
    %489 = vmatmul.mubr.f32.gmra.mrb[0].mxu0 %v120
    %v490 = vpop.f32.mrb[0].mxu0
    %v491 = vadd.f32 %v206, %v490
    %v492 = vpop.f32.mrb[0].mxu0
    %493 = vmatprep.mubr.f32.mxu0 %v125
    %494 = vmatmul.mubr.f32.gmra.mrb[0].mxu0 %v124
    %v495 = vpop.f32.mrb[0].mxu0
    %v496 = vadd.f32 %v206, %v495
    %v497 = vpop.f32.mrb[0].mxu0
    %498 = vmatprep.mubr.f32.mxu0 %v129
    %499 = vmatmul.mubr.f32.gmra.mrb[0].mxu0 %v128
    %v500 = vpop.f32.mrb[0].mxu0
    %v501 = vadd.f32 %v206, %v500
    %v502 = vpop.f32.mrb[0].mxu0
    %503 = vmatprep.mubr.f32.mxu0 %v133
    %504 = vmatmul.mubr.f32.gmra.mrb[0].mxu0 %v132
    %v505 = vpop.f32.mrb[0].mxu0
    %v506 = vadd.f32 %v206, %v505
    %v507 = vpop.f32.mrb[0].mxu0
    %508 = vmatprep.mubr.f32.mxu0 %v137
    %509 = vmatmul.mubr.f32.gmra.mrb[0].mxu0 %v136
    %v510 = vpop.f32.mrb[0].mxu0
    %v511 = vadd.f32 %v206, %v510
    %v512 = vpop.f32.mrb[0].mxu0
    %513 = vmatprep.mubr.f32.mxu0 %v141
    %514 = vmatmul.mubr.f32.gmra.mrb[0].mxu0 %v140
    %v515 = vpop.f32.mrb[0].mxu0
    %v516 = vadd.f32 %v206, %v515
    %v517 = vpop.f32.mrb[0].mxu0
    %518 = vmatprep.mubr.f32.mxu0 %v145
    %519 = vmatmul.mubr.f32.gmra.mrb[0].mxu0 %v144
    %v520 = vpop.f32.mrb[0].mxu0
    %v521 = vadd.f32 %v206, %v520
    %v522 = vpop.f32.mrb[0].mxu0
    %523 = vmatprep.mubr.f32.mxu0 %v149
    %524 = vmatmul.mubr.f32.gmra.mrb[0].mxu0 %v148
    %v525 = vpop.f32.mrb[0].mxu0
    %v526 = vadd.f32 %v206, %v525
    %v527 = vpop.f32.mrb[0].mxu0
    %528 = vdwg.mxu0
    %529 = vmatprep.subr.mxu0 0.0
    %530 = vmatpush1.msra.mxu0 %v184
    %531 = vmatprep.subr.mxu0 0.0
    %532 = vmatpush1.msra.mxu0 %v185
    %533 = vmatprep.subr.mxu0 0.0
    %534 = vmatpush1.msra.mxu0 %v186
    %535 = vmatprep.subr.mxu0 0.0
    %536 = vmatpush1.msra.mxu0 %v187
    %537 = vmatprep.subr.mxu0 0.0
    %538 = vmatpush1.msra.mxu0 %v188
    %539 = vmatprep.subr.mxu0 0.0
    %540 = vmatpush1.msra.mxu0 %v189
    %541 = vmatprep.subr.mxu0 0.0
    %542 = vmatpush1.msra.mxu0 %v190
    %543 = vmatprep.subr.mxu0 0.0
    %544 = vmatpush1.msra.mxu0 %v191
    %545 = vmatprep.subr.mxu0 0.0
    %546 = vmatpush1.msra.mxu0 %v192
    %547 = vmatprep.subr.mxu0 0.0
    %548 = vmatpush1.msra.mxu0 %v193
    %549 = vmatprep.subr.mxu0 0.0
    %550 = vmatpush1.msra.mxu0 %v194
    %551 = vmatprep.subr.mxu0 0.0
    %552 = vmatpush1.msra.mxu0 %v195
    %553 = vmatprep.subr.mxu0 0.0
    %554 = vmatpush1.msra.mxu0 %v196
    %555 = vmatprep.subr.mxu0 0.0
    %556 = vmatpush1.msra.mxu0 %v197
    %557 = vmatprep.subr.mxu0 0.0
    %558 = vmatpush1.msra.mxu0 %v198
    %559 = vmatprep.subr.mxu0 0.0
    %560 = vmatpush1.msra.mxu0 %v199
    %561 = vmatprep.subr.mxu0 0.0
    %562 = vmatpush1.msra.mxu0 %v200
    %563 = vmatprep.subr.mxu0 0.0
    %564 = vmatpush1.msra.mxu0 %v201
    %565 = vmatprep.subr.mxu0 0.0
    %566 = vmatpush1.msra.mxu0 0.0
    %567 = vmatprep.subr.mxu0 0.0
    %568 = vmatpush1.msra.mxu0 0.0
    %569 = vmatprep.subr.mxu0 0.0
    %570 = vmatpush1.msra.mxu0 0.0
    %571 = vmatprep.subr.mxu0 0.0
    %572 = vmatpush1.msra.mxu0 0.0
    %573 = vmatprep.subr.mxu0 0.0
    %574 = vmatpush1.msra.mxu0 0.0
    %575 = vmatprep.subr.mxu0 0.0
    %576 = vmatpush1.msra.mxu0 0.0
    %577 = vmatprep.subr.mxu0 0.0
    %578 = vmatpush1.msra.mxu0 0.0
    %579 = vmatprep.subr.mxu0 0.0
    %580 = vmatpush1.msra.mxu0 0.0
    %581 = vmatprep.subr.mxu0 0.0
    %582 = vmatpush1.msra.mxu0 0.0
    %583 = vmatprep.subr.mxu0 0.0
    %584 = vmatpush1.msra.mxu0 0.0
    %585 = vmatprep.subr.mxu0 0.0
    %586 = vmatpush1.msra.mxu0 0.0
    %587 = vmatprep.subr.mxu0 0.0
    %588 = vmatpush1.msra.mxu0 0.0
    %589 = vmatprep.subr.mxu0 0.0
    %590 = vmatpush1.msra.mxu0 0.0
    %591 = vmatprep.subr.mxu0 0.0
    %592 = vmatpush1.msra.mxu0 0.0
    %593 = vmatprep.mubr.f32.mxu0 %v209
    %594 = vmatmul.mubr.f32.gmra.mrb[0].mxu0 %v26
    %v595 = vpop.f32.mrb[0].mxu0
    %v596 = vadd.f32 %v371, %v595
    %v597 = vpop.f32.mrb[0].mxu0
    %598 = vmatprep.mubr.f32.mxu0 %v212
    %599 = vmatmul.mubr.f32.gmra.mrb[0].mxu0 %v30
    %v600 = vpop.f32.mrb[0].mxu0
    %v601 = vadd.f32 %v376, %v600
    %v602 = vpop.f32.mrb[0].mxu0
    %603 = vmatprep.mubr.f32.mxu0 %v215
    %604 = vmatmul.mubr.f32.gmra.mrb[0].mxu0 %v34
    %v605 = vpop.f32.mrb[0].mxu0
    %v606 = vadd.f32 %v381, %v605
    %v607 = vpop.f32.mrb[0].mxu0
    %608 = vmatprep.mubr.f32.mxu0 %v218
    %609 = vmatmul.mubr.f32.gmra.mrb[0].mxu0 %v38
    %v610 = vpop.f32.mrb[0].mxu0
    %v611 = vadd.f32 %v386, %v610
    %v612 = vpop.f32.mrb[0].mxu0
    %613 = vmatprep.mubr.f32.mxu0 %v221
    %614 = vmatmul.mubr.f32.gmra.mrb[0].mxu0 %v42
    %v615 = vpop.f32.mrb[0].mxu0
    %v616 = vadd.f32 %v391, %v615
    %v617 = vpop.f32.mrb[0].mxu0
    %618 = vmatprep.mubr.f32.mxu0 %v224
    %619 = vmatmul.mubr.f32.gmra.mrb[0].mxu0 %v46
    %v620 = vpop.f32.mrb[0].mxu0
    %v621 = vadd.f32 %v396, %v620
    %v622 = vpop.f32.mrb[0].mxu0
    %623 = vmatprep.mubr.f32.mxu0 %v227
    %624 = vmatmul.mubr.f32.gmra.mrb[0].mxu0 %v50
    %v625 = vpop.f32.mrb[0].mxu0
    %v626 = vadd.f32 %v401, %v625
    %v627 = vpop.f32.mrb[0].mxu0
    %628 = vmatprep.mubr.f32.mxu0 %v230
    %629 = vmatmul.mubr.f32.gmra.mrb[0].mxu0 %v54
    %v630 = vpop.f32.mrb[0].mxu0
    %v631 = vadd.f32 %v406, %v630
    %v632 = vpop.f32.mrb[0].mxu0
    %633 = vmatprep.mubr.f32.mxu0 %v233
    %634 = vmatmul.mubr.f32.gmra.mrb[0].mxu0 %v58
    %v635 = vpop.f32.mrb[0].mxu0
    %v636 = vadd.f32 %v411, %v635
    %v637 = vpop.f32.mrb[0].mxu0
    %638 = vmatprep.mubr.f32.mxu0 %v236
    %639 = vmatmul.mubr.f32.gmra.mrb[0].mxu0 %v62
    %v640 = vpop.f32.mrb[0].mxu0
    %v641 = vadd.f32 %v416, %v640
    %v642 = vpop.f32.mrb[0].mxu0
    %643 = vmatprep.mubr.f32.mxu0 %v239
    %644 = vmatmul.mubr.f32.gmra.mrb[0].mxu0 %v66
    %v645 = vpop.f32.mrb[0].mxu0
    %v646 = vadd.f32 %v421, %v645
    %v647 = vpop.f32.mrb[0].mxu0
    %648 = vmatprep.mubr.f32.mxu0 %v242
    %649 = vmatmul.mubr.f32.gmra.mrb[0].mxu0 %v70
    %v650 = vpop.f32.mrb[0].mxu0
    %v651 = vadd.f32 %v426, %v650
    %v652 = vpop.f32.mrb[0].mxu0
    %653 = vmatprep.mubr.f32.mxu0 %v245
    %654 = vmatmul.mubr.f32.gmra.mrb[0].mxu0 %v74
    %v655 = vpop.f32.mrb[0].mxu0
    %v656 = vadd.f32 %v431, %v655
    %v657 = vpop.f32.mrb[0].mxu0
    %658 = vmatprep.mubr.f32.mxu0 %v248
    %659 = vmatmul.mubr.f32.gmra.mrb[0].mxu0 %v78
    %v660 = vpop.f32.mrb[0].mxu0
    %v661 = vadd.f32 %v436, %v660
    %v662 = vpop.f32.mrb[0].mxu0
    %663 = vmatprep.mubr.f32.mxu0 %v251
    %664 = vmatmul.mubr.f32.gmra.mrb[0].mxu0 %v82
    %v665 = vpop.f32.mrb[0].mxu0
    %v666 = vadd.f32 %v441, %v665
    %v667 = vpop.f32.mrb[0].mxu0
    %668 = vmatprep.mubr.f32.mxu0 %v254
    %669 = vmatmul.mubr.f32.gmra.mrb[0].mxu0 %v86
    %v670 = vpop.f32.mrb[0].mxu0
    %v671 = vadd.f32 %v446, %v670
    %v672 = vpop.f32.mrb[0].mxu0
    %673 = vmatprep.mubr.f32.mxu0 %v257
    %674 = vmatmul.mubr.f32.gmra.mrb[0].mxu0 %v90
    %v675 = vpop.f32.mrb[0].mxu0
    %v676 = vadd.f32 %v451, %v675
    %v677 = vpop.f32.mrb[0].mxu0
    %678 = vmatprep.mubr.f32.mxu0 %v260
    %679 = vmatmul.mubr.f32.gmra.mrb[0].mxu0 %v94
    %v680 = vpop.f32.mrb[0].mxu0
    %v681 = vadd.f32 %v456, %v680
    %v682 = vpop.f32.mrb[0].mxu0
    %683 = vmatprep.mubr.f32.mxu0 %v263
    %684 = vmatmul.mubr.f32.gmra.mrb[0].mxu0 %v98
    %v685 = vpop.f32.mrb[0].mxu0
    %v686 = vadd.f32 %v461, %v685
    %v687 = vpop.f32.mrb[0].mxu0
    %688 = vmatprep.mubr.f32.mxu0 %v266
    %689 = vmatmul.mubr.f32.gmra.mrb[0].mxu0 %v102
    %v690 = vpop.f32.mrb[0].mxu0
    %v691 = vadd.f32 %v466, %v690
    %v692 = vpop.f32.mrb[0].mxu0
    %693 = vmatprep.mubr.f32.mxu0 %v269
    %694 = vmatmul.mubr.f32.gmra.mrb[0].mxu0 %v106
    %v695 = vpop.f32.mrb[0].mxu0
    %v696 = vadd.f32 %v471, %v695
    %v697 = vpop.f32.mrb[0].mxu0
    %698 = vmatprep.mubr.f32.mxu0 %v272
    %699 = vmatmul.mubr.f32.gmra.mrb[0].mxu0 %v110
    %v700 = vpop.f32.mrb[0].mxu0
    %v701 = vadd.f32 %v476, %v700
    %v702 = vpop.f32.mrb[0].mxu0
    %703 = vmatprep.mubr.f32.mxu0 %v275
    %704 = vmatmul.mubr.f32.gmra.mrb[0].mxu0 %v114
    %v705 = vpop.f32.mrb[0].mxu0
    %v706 = vadd.f32 %v481, %v705
    %v707 = vpop.f32.mrb[0].mxu0
    %708 = vmatprep.mubr.f32.mxu0 %v278
    %709 = vmatmul.mubr.f32.gmra.mrb[0].mxu0 %v118
    %v710 = vpop.f32.mrb[0].mxu0
    %v711 = vadd.f32 %v486, %v710
    %v712 = vpop.f32.mrb[0].mxu0
    %713 = vmatprep.mubr.f32.mxu0 %v281
    %714 = vmatmul.mubr.f32.gmra.mrb[0].mxu0 %v122
    %v715 = vpop.f32.mrb[0].mxu0
    %v716 = vadd.f32 %v491, %v715
    %v717 = vpop.f32.mrb[0].mxu0
    %718 = vmatprep.mubr.f32.mxu0 %v284
    %719 = vmatmul.mubr.f32.gmra.mrb[0].mxu0 %v126
    %v720 = vpop.f32.mrb[0].mxu0
    %v721 = vadd.f32 %v496, %v720
    %v722 = vpop.f32.mrb[0].mxu0
    %723 = vmatprep.mubr.f32.mxu0 %v287
    %724 = vmatmul.mubr.f32.gmra.mrb[0].mxu0 %v130
    %v725 = vpop.f32.mrb[0].mxu0
    %v726 = vadd.f32 %v501, %v725
    %v727 = vpop.f32.mrb[0].mxu0
    %728 = vmatprep.mubr.f32.mxu0 %v290
    %729 = vmatmul.mubr.f32.gmra.mrb[0].mxu0 %v134
    %v730 = vpop.f32.mrb[0].mxu0
    %v731 = vadd.f32 %v506, %v730
    %v732 = vpop.f32.mrb[0].mxu0
    %733 = vmatprep.mubr.f32.mxu0 %v293
    %734 = vmatmul.mubr.f32.gmra.mrb[0].mxu0 %v138
    %v735 = vpop.f32.mrb[0].mxu0
    %v736 = vadd.f32 %v511, %v735
    %v737 = vpop.f32.mrb[0].mxu0
    %738 = vmatprep.mubr.f32.mxu0 %v296
    %739 = vmatmul.mubr.f32.gmra.mrb[0].mxu0 %v142
    %v740 = vpop.f32.mrb[0].mxu0
    %v741 = vadd.f32 %v516, %v740
    %v742 = vpop.f32.mrb[0].mxu0
    %743 = vmatprep.mubr.f32.mxu0 %v299
    %744 = vmatmul.mubr.f32.gmra.mrb[0].mxu0 %v146
    %v745 = vpop.f32.mrb[0].mxu0
    %v746 = vadd.f32 %v521, %v745
    %v747 = vpop.f32.mrb[0].mxu0
    %748 = vmatprep.mubr.f32.mxu0 %v302
    %749 = vmatmul.mubr.f32.gmra.mrb[0].mxu0 %v150
    %v750 = vpop.f32.mrb[0].mxu0
    %v751 = vadd.f32 %v526, %v750
    %v752 = vpop.f32.mrb[0].mxu0
    %753 = vdwg.mxu0
    %v754 = vmax.f32 %v596, 0.0
    %v755 = vmax.f32 %v601, 0.0
    %v756 = vmax.f32 %v606, 0.0
    %v757 = vmax.f32 %v611, 0.0
    %v758 = vmax.f32 %v616, 0.0
    %v759 = vmax.f32 %v621, 0.0
    %v760 = vmax.f32 %v626, 0.0
    %v761 = vmax.f32 %v631, 0.0
    %v762 = vmax.f32 %v636, 0.0
    %v763 = vmax.f32 %v641, 0.0
    %v764 = vmax.f32 %v646, 0.0
    %v765 = vmax.f32 %v651, 0.0
    %v766 = vmax.f32 %v656, 0.0
    %v767 = vmax.f32 %v661, 0.0
    %v768 = vmax.f32 %v666, 0.0
    %v769 = vmax.f32 %v671, 0.0
    %v770 = vmax.f32 %v676, 0.0
    %v771 = vmax.f32 %v681, 0.0
    %v772 = vmax.f32 %v686, 0.0
    %v773 = vmax.f32 %v691, 0.0
    %v774 = vmax.f32 %v696, 0.0
    %v775 = vmax.f32 %v701, 0.0
    %v776 = vmax.f32 %v706, 0.0
    %v777 = vmax.f32 %v711, 0.0
    %v778 = vmax.f32 %v716, 0.0
    %v779 = vmax.f32 %v721, 0.0
    %v780 = vmax.f32 %v726, 0.0
    %v781 = vmax.f32 %v731, 0.0
    %v782 = vmax.f32 %v736, 0.0
    %v783 = vmax.f32 %v741, 0.0
    %v784 = vmax.f32 %v746, 0.0
    %v785 = vmax.f32 %v751, 0.0
    %v786 = vld [vmem:[%s2] sm:$0xff]
    %v787 = vld [vmem:[%s2 + $0x8] sm:$0xff]
    %v788 = vld [vmem:[%s2 + $0x10] sm:$0xff]
    %v789 = vld [vmem:[%s2 + $0x18] sm:$0xff]
    %v790 = vld [vmem:[%s2 + $0x20] sm:$0xff]
    %v791 = vld [vmem:[%s2 + $0x28] sm:$0xff]
    %v792 = vld [vmem:[%s2 + $0x30] sm:$0xff]
    %v793 = vld [vmem:[%s2 + $0x38] sm:$0xff]
    %v794 = vld [vmem:[%s2 + $0x40] sm:$0xff]
    %v795 = vld [vmem:[%s2 + $0x48] sm:$0xff]
    %v796 = vld [vmem:[%s2 + $0x50] sm:$0xff]
    %v797 = vld [vmem:[%s2 + $0x58] sm:$0xff]
    %v798 = vld [vmem:[%s2 + $0x60] sm:$0xff]
    %v799 = vld [vmem:[%s2 + $0x68] sm:$0xff]
    %v800 = vld [vmem:[%s2 + $0x70] sm:$0xff]
    %v801 = vld [vmem:[%s2 + $0x78] sm:$0xff]
    %v802 = vld [vmem:[%s5 + $0x1] sm:$0x1]
    %v803 = vlaneseq
    %v804 = vshrl.u32 %v803, 7
    %v805 = vsub.s32 0, %v804
    %v806 = vrot.slane %v802, %v805
    %807 = vmatprep.subr.mxu0 0.0
    %808 = vmatpush1.msra.mxu0 %v786
    %809 = vmatprep.subr.mxu0 0.0
    %810 = vmatpush1.msra.mxu0 %v787
    %811 = vmatprep.subr.mxu0 0.0
    %812 = vmatpush1.msra.mxu0 %v788
    %813 = vmatprep.subr.mxu0 0.0
    %814 = vmatpush1.msra.mxu0 %v789
    %815 = vmatprep.subr.mxu0 0.0
    %816 = vmatpush1.msra.mxu0 %v790
    %817 = vmatprep.subr.mxu0 0.0
    %818 = vmatpush1.msra.mxu0 %v791
    %819 = vmatprep.subr.mxu0 0.0
    %820 = vmatpush1.msra.mxu0 %v792
    %821 = vmatprep.subr.mxu0 0.0
    %822 = vmatpush1.msra.mxu0 %v793
    %823 = vmatprep.subr.mxu0 0.0
    %824 = vmatpush1.msra.mxu0 %v794
    %825 = vmatprep.subr.mxu0 0.0
    %826 = vmatpush1.msra.mxu0 %v795
    %827 = vmatprep.subr.mxu0 0.0
    %828 = vmatpush1.msra.mxu0 %v796
    %829 = vmatprep.subr.mxu0 0.0
    %830 = vmatpush1.msra.mxu0 %v797
    %831 = vmatprep.subr.mxu0 0.0
    %832 = vmatpush1.msra.mxu0 %v798
    %833 = vmatprep.subr.mxu0 0.0
    %834 = vmatpush1.msra.mxu0 %v799
    %835 = vmatprep.subr.mxu0 0.0
    %836 = vmatpush1.msra.mxu0 %v800
    %837 = vmatprep.subr.mxu0 0.0
    %838 = vmatpush1.msra.mxu0 %v801
    %839 = vmatprep.subr.mxu0 0.0
    %840 = vmatpush1.msra.mxu0 0.0
    %841 = vmatprep.subr.mxu0 0.0
    %842 = vmatpush1.msra.mxu0 0.0
    %843 = vmatprep.subr.mxu0 0.0
    %844 = vmatpush1.msra.mxu0 0.0
    %845 = vmatprep.subr.mxu0 0.0
    %846 = vmatpush1.msra.mxu0 0.0
    %847 = vmatprep.subr.mxu0 0.0
    %848 = vmatpush1.msra.mxu0 0.0
    %849 = vmatprep.subr.mxu0 0.0
    %850 = vmatpush1.msra.mxu0 0.0
    %851 = vmatprep.subr.mxu0 0.0
    %852 = vmatpush1.msra.mxu0 0.0
    %853 = vmatprep.subr.mxu0 0.0
    %854 = vmatpush1.msra.mxu0 0.0
    %855 = vmatprep.subr.mxu0 0.0
    %856 = vmatpush1.msra.mxu0 0.0
    %857 = vmatprep.subr.mxu0 0.0
    %858 = vmatpush1.msra.mxu0 0.0
    %859 = vmatprep.subr.mxu0 0.0
    %860 = vmatpush1.msra.mxu0 0.0
    %861 = vmatprep.subr.mxu0 0.0
    %862 = vmatpush1.msra.mxu0 0.0
    %863 = vmatprep.subr.mxu0 0.0
    %864 = vmatpush1.msra.mxu0 0.0
    %865 = vmatprep.subr.mxu0 0.0
    %866 = vmatpush1.msra.mxu0 0.0
    %867 = vmatprep.subr.mxu0 0.0
    %868 = vmatpush1.msra.mxu0 0.0
    %869 = vmatprep.subr.mxu0 0.0
    %870 = vmatpush1.msra.mxu0 0.0
    %871 = vmatprep.mubr.f32.mxu0 0.0
    %872 = vmatmul.mubr.f32.gmra.mrb[0].mxu0 %v754
    %v873 = vpop.f32.mrb[0].mxu0
    %v874 = vadd.f32 %v806, %v873
    %v875 = vpop.f32.mrb[0].mxu0
    %876 = vmatprep.mubr.f32.mxu0 0.0
    %877 = vmatmul.mubr.f32.gmra.mrb[0].mxu0 %v755
    %v878 = vpop.f32.mrb[0].mxu0
    %v879 = vadd.f32 %v806, %v878
    %v880 = vpop.f32.mrb[0].mxu0
    %881 = vmatprep.mubr.f32.mxu0 0.0
    %882 = vmatmul.mubr.f32.gmra.mrb[0].mxu0 %v756
    %v883 = vpop.f32.mrb[0].mxu0
    %v884 = vadd.f32 %v806, %v883
    %v885 = vpop.f32.mrb[0].mxu0
    %886 = vmatprep.mubr.f32.mxu0 0.0
    %887 = vmatmul.mubr.f32.gmra.mrb[0].mxu0 %v757
    %v888 = vpop.f32.mrb[0].mxu0
    %v889 = vadd.f32 %v806, %v888
    %v890 = vpop.f32.mrb[0].mxu0
    %891 = vmatprep.mubr.f32.mxu0 0.0
    %892 = vmatmul.mubr.f32.gmra.mrb[0].mxu0 %v758
    %v893 = vpop.f32.mrb[0].mxu0
    %v894 = vadd.f32 %v806, %v893
    %v895 = vpop.f32.mrb[0].mxu0
    %896 = vmatprep.mubr.f32.mxu0 0.0
    %897 = vmatmul.mubr.f32.gmra.mrb[0].mxu0 %v759
    %v898 = vpop.f32.mrb[0].mxu0
    %v899 = vadd.f32 %v806, %v898
    %v900 = vpop.f32.mrb[0].mxu0
    %901 = vmatprep.mubr.f32.mxu0 0.0
    %902 = vmatmul.mubr.f32.gmra.mrb[0].mxu0 %v760
    %v903 = vpop.f32.mrb[0].mxu0
    %v904 = vadd.f32 %v806, %v903
    %v905 = vpop.f32.mrb[0].mxu0
    %906 = vmatprep.mubr.f32.mxu0 0.0
    %907 = vmatmul.mubr.f32.gmra.mrb[0].mxu0 %v761
    %v908 = vpop.f32.mrb[0].mxu0
    %v909 = vadd.f32 %v806, %v908
    %v910 = vpop.f32.mrb[0].mxu0
    %911 = vmatprep.mubr.f32.mxu0 0.0
    %912 = vmatmul.mubr.f32.gmra.mrb[0].mxu0 %v762
    %v913 = vpop.f32.mrb[0].mxu0
    %v914 = vadd.f32 %v806, %v913
    %v915 = vpop.f32.mrb[0].mxu0
    %916 = vmatprep.mubr.f32.mxu0 0.0
    %917 = vmatmul.mubr.f32.gmra.mrb[0].mxu0 %v763
    %v918 = vpop.f32.mrb[0].mxu0
    %v919 = vadd.f32 %v806, %v918
    %v920 = vpop.f32.mrb[0].mxu0
    %921 = vmatprep.mubr.f32.mxu0 0.0
    %922 = vmatmul.mubr.f32.gmra.mrb[0].mxu0 %v764
    %v923 = vpop.f32.mrb[0].mxu0
    %v924 = vadd.f32 %v806, %v923
    %v925 = vpop.f32.mrb[0].mxu0
    %926 = vmatprep.mubr.f32.mxu0 0.0
    %927 = vmatmul.mubr.f32.gmra.mrb[0].mxu0 %v765
    %v928 = vpop.f32.mrb[0].mxu0
    %v929 = vadd.f32 %v806, %v928
    %v930 = vpop.f32.mrb[0].mxu0
    %931 = vmatprep.mubr.f32.mxu0 0.0
    %932 = vmatmul.mubr.f32.gmra.mrb[0].mxu0 %v766
    %v933 = vpop.f32.mrb[0].mxu0
    %v934 = vadd.f32 %v806, %v933
    %v935 = vpop.f32.mrb[0].mxu0
    %936 = vmatprep.mubr.f32.mxu0 0.0
    %937 = vmatmul.mubr.f32.gmra.mrb[0].mxu0 %v767
    %v938 = vpop.f32.mrb[0].mxu0
    %v939 = vadd.f32 %v806, %v938
    %v940 = vpop.f32.mrb[0].mxu0
    %941 = vmatprep.mubr.f32.mxu0 0.0
    %942 = vmatmul.mubr.f32.gmra.mrb[0].mxu0 %v768
    %v943 = vpop.f32.mrb[0].mxu0
    %v944 = vadd.f32 %v806, %v943
    %v945 = vpop.f32.mrb[0].mxu0
    %946 = vmatprep.mubr.f32.mxu0 0.0
    %947 = vmatmul.mubr.f32.gmra.mrb[0].mxu0 %v769
    %v948 = vpop.f32.mrb[0].mxu0
    %v949 = vadd.f32 %v806, %v948
    %v950 = vpop.f32.mrb[0].mxu0
    %951 = vmatprep.mubr.f32.mxu0 0.0
    %952 = vmatmul.mubr.f32.gmra.mrb[0].mxu0 %v770
    %v953 = vpop.f32.mrb[0].mxu0
    %v954 = vadd.f32 %v806, %v953
    %v955 = vpop.f32.mrb[0].mxu0
    %956 = vmatprep.mubr.f32.mxu0 0.0
    %957 = vmatmul.mubr.f32.gmra.mrb[0].mxu0 %v771
    %v958 = vpop.f32.mrb[0].mxu0
    %v959 = vadd.f32 %v806, %v958
    %v960 = vpop.f32.mrb[0].mxu0
    %961 = vmatprep.mubr.f32.mxu0 0.0
    %962 = vmatmul.mubr.f32.gmra.mrb[0].mxu0 %v772
    %v963 = vpop.f32.mrb[0].mxu0
    %v964 = vadd.f32 %v806, %v963
    %v965 = vpop.f32.mrb[0].mxu0
    %966 = vmatprep.mubr.f32.mxu0 0.0
    %967 = vmatmul.mubr.f32.gmra.mrb[0].mxu0 %v773
    %v968 = vpop.f32.mrb[0].mxu0
    %v969 = vadd.f32 %v806, %v968
    %v970 = vpop.f32.mrb[0].mxu0
    %971 = vmatprep.mubr.f32.mxu0 0.0
    %972 = vmatmul.mubr.f32.gmra.mrb[0].mxu0 %v774
    %v973 = vpop.f32.mrb[0].mxu0
    %v974 = vadd.f32 %v806, %v973
    %v975 = vpop.f32.mrb[0].mxu0
    %976 = vmatprep.mubr.f32.mxu0 0.0
    %977 = vmatmul.mubr.f32.gmra.mrb[0].mxu0 %v775
    %v978 = vpop.f32.mrb[0].mxu0
    %v979 = vadd.f32 %v806, %v978
    %v980 = vpop.f32.mrb[0].mxu0
    %981 = vmatprep.mubr.f32.mxu0 0.0
    %982 = vmatmul.mubr.f32.gmra.mrb[0].mxu0 %v776
    %v983 = vpop.f32.mrb[0].mxu0
    %v984 = vadd.f32 %v806, %v983
    %v985 = vpop.f32.mrb[0].mxu0
    %986 = vmatprep.mubr.f32.mxu0 0.0
    %987 = vmatmul.mubr.f32.gmra.mrb[0].mxu0 %v777
    %v988 = vpop.f32.mrb[0].mxu0
    %v989 = vadd.f32 %v806, %v988
    %v990 = vpop.f32.mrb[0].mxu0
    %991 = vmatprep.mubr.f32.mxu0 0.0
    %992 = vmatmul.mubr.f32.gmra.mrb[0].mxu0 %v778
    %v993 = vpop.f32.mrb[0].mxu0
    %v994 = vadd.f32 %v806, %v993
    %v995 = vpop.f32.mrb[0].mxu0
    %996 = vmatprep.mubr.f32.mxu0 0.0
    %997 = vmatmul.mubr.f32.gmra.mrb[0].mxu0 %v779
    %v998 = vpop.f32.mrb[0].mxu0
    %v999 = vadd.f32 %v806, %v998
    %v1000 = vpop.f32.mrb[0].mxu0
    %1001 = vmatprep.mubr.f32.mxu0 0.0
    %1002 = vmatmul.mubr.f32.gmra.mrb[0].mxu0 %v780
    %v1003 = vpop.f32.mrb[0].mxu0
    %v1004 = vadd.f32 %v806, %v1003
    %v1005 = vpop.f32.mrb[0].mxu0
    %1006 = vmatprep.mubr.f32.mxu0 0.0
    %1007 = vmatmul.mubr.f32.gmra.mrb[0].mxu0 %v781
    %v1008 = vpop.f32.mrb[0].mxu0
    %v1009 = vadd.f32 %v806, %v1008
    %v1010 = vpop.f32.mrb[0].mxu0
    %1011 = vmatprep.mubr.f32.mxu0 0.0
    %1012 = vmatmul.mubr.f32.gmra.mrb[0].mxu0 %v782
    %v1013 = vpop.f32.mrb[0].mxu0
    %v1014 = vadd.f32 %v806, %v1013
    %v1015 = vpop.f32.mrb[0].mxu0
    %1016 = vmatprep.mubr.f32.mxu0 0.0
    %1017 = vmatmul.mubr.f32.gmra.mrb[0].mxu0 %v783
    %v1018 = vpop.f32.mrb[0].mxu0
    %v1019 = vadd.f32 %v806, %v1018
    %v1020 = vpop.f32.mrb[0].mxu0
    %1021 = vmatprep.mubr.f32.mxu0 0.0
    %1022 = vmatmul.mubr.f32.gmra.mrb[0].mxu0 %v784
    %v1023 = vpop.f32.mrb[0].mxu0
    %v1024 = vadd.f32 %v806, %v1023
    %v1025 = vpop.f32.mrb[0].mxu0
    %1026 = vmatprep.mubr.f32.mxu0 0.0
    %1027 = vmatmul.mubr.f32.gmra.mrb[0].mxu0 %v785
    %v1028 = vpop.f32.mrb[0].mxu0
    %v1029 = vadd.f32 %v806, %v1028
    %v1030 = vpop.f32.mrb[0].mxu0
    %1031 = vdwg.mxu0
    %v1032 = vmax.f32 %v874, 0.0
    %v1033 = vmax.f32 %v879, 0.0
    %v1034 = vmax.f32 %v884, 0.0
    %v1035 = vmax.f32 %v889, 0.0
    %v1036 = vmax.f32 %v894, 0.0
    %v1037 = vmax.f32 %v899, 0.0
    %v1038 = vmax.f32 %v904, 0.0
    %v1039 = vmax.f32 %v909, 0.0
    %v1040 = vmax.f32 %v914, 0.0
    %v1041 = vmax.f32 %v919, 0.0
    %v1042 = vmax.f32 %v924, 0.0
    %v1043 = vmax.f32 %v929, 0.0
    %v1044 = vmax.f32 %v934, 0.0
    %v1045 = vmax.f32 %v939, 0.0
    %v1046 = vmax.f32 %v944, 0.0
    %v1047 = vmax.f32 %v949, 0.0
    %v1048 = vmax.f32 %v954, 0.0
    %v1049 = vmax.f32 %v959, 0.0
    %v1050 = vmax.f32 %v964, 0.0
    %v1051 = vmax.f32 %v969, 0.0
    %v1052 = vmax.f32 %v974, 0.0
    %v1053 = vmax.f32 %v979, 0.0
    %v1054 = vmax.f32 %v984, 0.0
    %v1055 = vmax.f32 %v989, 0.0
    %v1056 = vmax.f32 %v994, 0.0
    %v1057 = vmax.f32 %v999, 0.0
    %v1058 = vmax.f32 %v1004, 0.0
    %v1059 = vmax.f32 %v1009, 0.0
    %v1060 = vmax.f32 %v1014, 0.0
    %v1061 = vmax.f32 %v1019, 0.0
    %v1062 = vmax.f32 %v1024, 0.0
    %v1063 = vmax.f32 %v1029, 0.0
    %v1064 = vld [vmem:[%s3] sm:$0xff]
    %v1065 = vld [vmem:[%s3 + $0x8] sm:$0xff]
    %v1066 = vld [vmem:[%s3 + $0x10] sm:$0xff]
    %v1067 = vld [vmem:[%s3 + $0x18] sm:$0xff]
    %v1068 = vld [vmem:[%s3 + $0x20] sm:$0xff]
    %v1069 = vld [vmem:[%s3 + $0x28] sm:$0xff]
    %v1070 = vld [vmem:[%s3 + $0x30] sm:$0xff]
    %v1071 = vld [vmem:[%s3 + $0x38] sm:$0xff]
    %v1072 = vld [vmem:[%s3 + $0x40] sm:$0xff]
    %v1073 = vld [vmem:[%s3 + $0x48] sm:$0xff]
    %v1074 = vld [vmem:[%s3 + $0x50] sm:$0xff]
    %v1075 = vld [vmem:[%s3 + $0x58] sm:$0xff]
    %v1076 = vld [vmem:[%s3 + $0x60] sm:$0xff]
    %v1077 = vld [vmem:[%s3 + $0x68] sm:$0xff]
    %v1078 = vld [vmem:[%s3 + $0x70] sm:$0xff]
    %v1079 = vld [vmem:[%s3 + $0x78] sm:$0xff]
    %v1080 = vld [vmem:[%s5 + $0x2] sm:$0x1]
    %v1081 = vlaneseq
    %v1082 = vshrl.u32 %v1081, 7
    %v1083 = vsub.s32 0, %v1082
    %v1084 = vrot.slane %v1080, %v1083
    %1085 = vmatprep.subr.mxu0 0.0
    %1086 = vmatpush1.msra.mxu0 %v1064
    %1087 = vmatprep.subr.mxu0 0.0
    %1088 = vmatpush1.msra.mxu0 %v1065
    %1089 = vmatprep.subr.mxu0 0.0
    %1090 = vmatpush1.msra.mxu0 %v1066
    %1091 = vmatprep.subr.mxu0 0.0
    %1092 = vmatpush1.msra.mxu0 %v1067
    %1093 = vmatprep.subr.mxu0 0.0
    %1094 = vmatpush1.msra.mxu0 %v1068
    %1095 = vmatprep.subr.mxu0 0.0
    %1096 = vmatpush1.msra.mxu0 %v1069
    %1097 = vmatprep.subr.mxu0 0.0
    %1098 = vmatpush1.msra.mxu0 %v1070
    %1099 = vmatprep.subr.mxu0 0.0
    %1100 = vmatpush1.msra.mxu0 %v1071
    %1101 = vmatprep.subr.mxu0 0.0
    %1102 = vmatpush1.msra.mxu0 %v1072
    %1103 = vmatprep.subr.mxu0 0.0
    %1104 = vmatpush1.msra.mxu0 %v1073
    %1105 = vmatprep.subr.mxu0 0.0
    %1106 = vmatpush1.msra.mxu0 %v1074
    %1107 = vmatprep.subr.mxu0 0.0
    %1108 = vmatpush1.msra.mxu0 %v1075
    %1109 = vmatprep.subr.mxu0 0.0
    %1110 = vmatpush1.msra.mxu0 %v1076
    %1111 = vmatprep.subr.mxu0 0.0
    %1112 = vmatpush1.msra.mxu0 %v1077
    %1113 = vmatprep.subr.mxu0 0.0
    %1114 = vmatpush1.msra.mxu0 %v1078
    %1115 = vmatprep.subr.mxu0 0.0
    %1116 = vmatpush1.msra.mxu0 %v1079
    %1117 = vmatprep.subr.mxu0 0.0
    %1118 = vmatpush1.msra.mxu0 0.0
    %1119 = vmatprep.subr.mxu0 0.0
    %1120 = vmatpush1.msra.mxu0 0.0
    %1121 = vmatprep.subr.mxu0 0.0
    %1122 = vmatpush1.msra.mxu0 0.0
    %1123 = vmatprep.subr.mxu0 0.0
    %1124 = vmatpush1.msra.mxu0 0.0
    %1125 = vmatprep.subr.mxu0 0.0
    %1126 = vmatpush1.msra.mxu0 0.0
    %1127 = vmatprep.subr.mxu0 0.0
    %1128 = vmatpush1.msra.mxu0 0.0
    %1129 = vmatprep.subr.mxu0 0.0
    %1130 = vmatpush1.msra.mxu0 0.0
    %1131 = vmatprep.subr.mxu0 0.0
    %1132 = vmatpush1.msra.mxu0 0.0
    %1133 = vmatprep.subr.mxu0 0.0
    %1134 = vmatpush1.msra.mxu0 0.0
    %1135 = vmatprep.subr.mxu0 0.0
    %1136 = vmatpush1.msra.mxu0 0.0
    %1137 = vmatprep.subr.mxu0 0.0
    %1138 = vmatpush1.msra.mxu0 0.0
    %1139 = vmatprep.subr.mxu0 0.0
    %1140 = vmatpush1.msra.mxu0 0.0
    %1141 = vmatprep.subr.mxu0 0.0
    %1142 = vmatpush1.msra.mxu0 0.0
    %1143 = vmatprep.subr.mxu0 0.0
    %1144 = vmatpush1.msra.mxu0 0.0
    %1145 = vmatprep.subr.mxu0 0.0
    %1146 = vmatpush1.msra.mxu0 0.0
    %1147 = vmatprep.subr.mxu0 0.0
    %1148 = vmatpush1.msra.mxu0 0.0
    %1149 = vmatprep.mubr.f32.mxu0 0.0
    %1150 = vmatmul.mubr.f32.gmra.mrb[0].mxu0 %v1032
    %v1151 = vpop.f32.mrb[0].mxu0
    %v1152 = vadd.f32 %v1084, %v1151
    %v1153 = vpop.f32.mrb[0].mxu0
    %1154 = vmatprep.mubr.f32.mxu0 0.0
    %1155 = vmatmul.mubr.f32.gmra.mrb[0].mxu0 %v1033
    %v1156 = vpop.f32.mrb[0].mxu0
    %v1157 = vadd.f32 %v1084, %v1156
    %v1158 = vpop.f32.mrb[0].mxu0
    %1159 = vmatprep.mubr.f32.mxu0 0.0
    %1160 = vmatmul.mubr.f32.gmra.mrb[0].mxu0 %v1034
    %v1161 = vpop.f32.mrb[0].mxu0
    %v1162 = vadd.f32 %v1084, %v1161
    %v1163 = vpop.f32.mrb[0].mxu0
    %1164 = vmatprep.mubr.f32.mxu0 0.0
    %1165 = vmatmul.mubr.f32.gmra.mrb[0].mxu0 %v1035
    %v1166 = vpop.f32.mrb[0].mxu0
    %v1167 = vadd.f32 %v1084, %v1166
    %v1168 = vpop.f32.mrb[0].mxu0
    %1169 = vmatprep.mubr.f32.mxu0 0.0
    %1170 = vmatmul.mubr.f32.gmra.mrb[0].mxu0 %v1036
    %v1171 = vpop.f32.mrb[0].mxu0
    %v1172 = vadd.f32 %v1084, %v1171
    %v1173 = vpop.f32.mrb[0].mxu0
    %1174 = vmatprep.mubr.f32.mxu0 0.0
    %1175 = vmatmul.mubr.f32.gmra.mrb[0].mxu0 %v1037
    %v1176 = vpop.f32.mrb[0].mxu0
    %v1177 = vadd.f32 %v1084, %v1176
    %v1178 = vpop.f32.mrb[0].mxu0
    %1179 = vmatprep.mubr.f32.mxu0 0.0
    %1180 = vmatmul.mubr.f32.gmra.mrb[0].mxu0 %v1038
    %v1181 = vpop.f32.mrb[0].mxu0
    %v1182 = vadd.f32 %v1084, %v1181
    %v1183 = vpop.f32.mrb[0].mxu0
    %1184 = vmatprep.mubr.f32.mxu0 0.0
    %1185 = vmatmul.mubr.f32.gmra.mrb[0].mxu0 %v1039
    %v1186 = vpop.f32.mrb[0].mxu0
    %v1187 = vadd.f32 %v1084, %v1186
    %v1188 = vpop.f32.mrb[0].mxu0
    %1189 = vmatprep.mubr.f32.mxu0 0.0
    %1190 = vmatmul.mubr.f32.gmra.mrb[0].mxu0 %v1040
    %v1191 = vpop.f32.mrb[0].mxu0
    %v1192 = vadd.f32 %v1084, %v1191
    %v1193 = vpop.f32.mrb[0].mxu0
    %1194 = vmatprep.mubr.f32.mxu0 0.0
    %1195 = vmatmul.mubr.f32.gmra.mrb[0].mxu0 %v1041
    %v1196 = vpop.f32.mrb[0].mxu0
    %v1197 = vadd.f32 %v1084, %v1196
    %v1198 = vpop.f32.mrb[0].mxu0
    %1199 = vmatprep.mubr.f32.mxu0 0.0
    %1200 = vmatmul.mubr.f32.gmra.mrb[0].mxu0 %v1042
    %v1201 = vpop.f32.mrb[0].mxu0
    %v1202 = vadd.f32 %v1084, %v1201
    %v1203 = vpop.f32.mrb[0].mxu0
    %1204 = vmatprep.mubr.f32.mxu0 0.0
    %1205 = vmatmul.mubr.f32.gmra.mrb[0].mxu0 %v1043
    %v1206 = vpop.f32.mrb[0].mxu0
    %v1207 = vadd.f32 %v1084, %v1206
    %v1208 = vpop.f32.mrb[0].mxu0
    %1209 = vmatprep.mubr.f32.mxu0 0.0
    %1210 = vmatmul.mubr.f32.gmra.mrb[0].mxu0 %v1044
    %v1211 = vpop.f32.mrb[0].mxu0
    %v1212 = vadd.f32 %v1084, %v1211
    %v1213 = vpop.f32.mrb[0].mxu0
    %1214 = vmatprep.mubr.f32.mxu0 0.0
    %1215 = vmatmul.mubr.f32.gmra.mrb[0].mxu0 %v1045
    %v1216 = vpop.f32.mrb[0].mxu0
    %v1217 = vadd.f32 %v1084, %v1216
    %v1218 = vpop.f32.mrb[0].mxu0
    %1219 = vmatprep.mubr.f32.mxu0 0.0
    %1220 = vmatmul.mubr.f32.gmra.mrb[0].mxu0 %v1046
    %v1221 = vpop.f32.mrb[0].mxu0
    %v1222 = vadd.f32 %v1084, %v1221
    %v1223 = vpop.f32.mrb[0].mxu0
    %1224 = vmatprep.mubr.f32.mxu0 0.0
    %1225 = vmatmul.mubr.f32.gmra.mrb[0].mxu0 %v1047
    %v1226 = vpop.f32.mrb[0].mxu0
    %v1227 = vadd.f32 %v1084, %v1226
    %v1228 = vpop.f32.mrb[0].mxu0
    %1229 = vmatprep.mubr.f32.mxu0 0.0
    %1230 = vmatmul.mubr.f32.gmra.mrb[0].mxu0 %v1048
    %v1231 = vpop.f32.mrb[0].mxu0
    %v1232 = vadd.f32 %v1084, %v1231
    %v1233 = vpop.f32.mrb[0].mxu0
    %1234 = vmatprep.mubr.f32.mxu0 0.0
    %1235 = vmatmul.mubr.f32.gmra.mrb[0].mxu0 %v1049
    %v1236 = vpop.f32.mrb[0].mxu0
    %v1237 = vadd.f32 %v1084, %v1236
    %v1238 = vpop.f32.mrb[0].mxu0
    %1239 = vmatprep.mubr.f32.mxu0 0.0
    %1240 = vmatmul.mubr.f32.gmra.mrb[0].mxu0 %v1050
    %v1241 = vpop.f32.mrb[0].mxu0
    %v1242 = vadd.f32 %v1084, %v1241
    %v1243 = vpop.f32.mrb[0].mxu0
    %1244 = vmatprep.mubr.f32.mxu0 0.0
    %1245 = vmatmul.mubr.f32.gmra.mrb[0].mxu0 %v1051
    %v1246 = vpop.f32.mrb[0].mxu0
    %v1247 = vadd.f32 %v1084, %v1246
    %v1248 = vpop.f32.mrb[0].mxu0
    %1249 = vmatprep.mubr.f32.mxu0 0.0
    %1250 = vmatmul.mubr.f32.gmra.mrb[0].mxu0 %v1052
    %v1251 = vpop.f32.mrb[0].mxu0
    %v1252 = vadd.f32 %v1084, %v1251
    %v1253 = vpop.f32.mrb[0].mxu0
    %1254 = vmatprep.mubr.f32.mxu0 0.0
    %1255 = vmatmul.mubr.f32.gmra.mrb[0].mxu0 %v1053
    %v1256 = vpop.f32.mrb[0].mxu0
    %v1257 = vadd.f32 %v1084, %v1256
    %v1258 = vpop.f32.mrb[0].mxu0
    %1259 = vmatprep.mubr.f32.mxu0 0.0
    %1260 = vmatmul.mubr.f32.gmra.mrb[0].mxu0 %v1054
    %v1261 = vpop.f32.mrb[0].mxu0
    %v1262 = vadd.f32 %v1084, %v1261
    %v1263 = vpop.f32.mrb[0].mxu0
    %1264 = vmatprep.mubr.f32.mxu0 0.0
    %1265 = vmatmul.mubr.f32.gmra.mrb[0].mxu0 %v1055
    %v1266 = vpop.f32.mrb[0].mxu0
    %v1267 = vadd.f32 %v1084, %v1266
    %v1268 = vpop.f32.mrb[0].mxu0
    %1269 = vmatprep.mubr.f32.mxu0 0.0
    %1270 = vmatmul.mubr.f32.gmra.mrb[0].mxu0 %v1056
    %v1271 = vpop.f32.mrb[0].mxu0
    %v1272 = vadd.f32 %v1084, %v1271
    %v1273 = vpop.f32.mrb[0].mxu0
    %1274 = vmatprep.mubr.f32.mxu0 0.0
    %1275 = vmatmul.mubr.f32.gmra.mrb[0].mxu0 %v1057
    %v1276 = vpop.f32.mrb[0].mxu0
    %v1277 = vadd.f32 %v1084, %v1276
    %v1278 = vpop.f32.mrb[0].mxu0
    %1279 = vmatprep.mubr.f32.mxu0 0.0
    %1280 = vmatmul.mubr.f32.gmra.mrb[0].mxu0 %v1058
    %v1281 = vpop.f32.mrb[0].mxu0
    %v1282 = vadd.f32 %v1084, %v1281
    %v1283 = vpop.f32.mrb[0].mxu0
    %1284 = vmatprep.mubr.f32.mxu0 0.0
    %1285 = vmatmul.mubr.f32.gmra.mrb[0].mxu0 %v1059
    %v1286 = vpop.f32.mrb[0].mxu0
    %v1287 = vadd.f32 %v1084, %v1286
    %v1288 = vpop.f32.mrb[0].mxu0
    %1289 = vmatprep.mubr.f32.mxu0 0.0
    %1290 = vmatmul.mubr.f32.gmra.mrb[0].mxu0 %v1060
    %v1291 = vpop.f32.mrb[0].mxu0
    %v1292 = vadd.f32 %v1084, %v1291
    %v1293 = vpop.f32.mrb[0].mxu0
    %1294 = vmatprep.mubr.f32.mxu0 0.0
    %1295 = vmatmul.mubr.f32.gmra.mrb[0].mxu0 %v1061
    %v1296 = vpop.f32.mrb[0].mxu0
    %v1297 = vadd.f32 %v1084, %v1296
    %v1298 = vpop.f32.mrb[0].mxu0
    %1299 = vmatprep.mubr.f32.mxu0 0.0
    %1300 = vmatmul.mubr.f32.gmra.mrb[0].mxu0 %v1062
    %v1301 = vpop.f32.mrb[0].mxu0
    %v1302 = vadd.f32 %v1084, %v1301
    %v1303 = vpop.f32.mrb[0].mxu0
    %1304 = vmatprep.mubr.f32.mxu0 0.0
    %1305 = vmatmul.mubr.f32.gmra.mrb[0].mxu0 %v1063
    %v1306 = vpop.f32.mrb[0].mxu0
    %v1307 = vadd.f32 %v1084, %v1306
    %v1308 = vpop.f32.mrb[0].mxu0
    %1309 = vdwg.mxu0
    %v1310 = vmax.f32 %v1152, 0.0
    %v1311 = vmax.f32 %v1157, 0.0
    %v1312 = vmax.f32 %v1162, 0.0
    %v1313 = vmax.f32 %v1167, 0.0
    %v1314 = vmax.f32 %v1172, 0.0
    %v1315 = vmax.f32 %v1177, 0.0
    %v1316 = vmax.f32 %v1182, 0.0
    %v1317 = vmax.f32 %v1187, 0.0
    %v1318 = vmax.f32 %v1192, 0.0
    %v1319 = vmax.f32 %v1197, 0.0
    %v1320 = vmax.f32 %v1202, 0.0
    %v1321 = vmax.f32 %v1207, 0.0
    %v1322 = vmax.f32 %v1212, 0.0
    %v1323 = vmax.f32 %v1217, 0.0
    %v1324 = vmax.f32 %v1222, 0.0
    %v1325 = vmax.f32 %v1227, 0.0
    %v1326 = vmax.f32 %v1232, 0.0
    %v1327 = vmax.f32 %v1237, 0.0
    %v1328 = vmax.f32 %v1242, 0.0
    %v1329 = vmax.f32 %v1247, 0.0
    %v1330 = vmax.f32 %v1252, 0.0
    %v1331 = vmax.f32 %v1257, 0.0
    %v1332 = vmax.f32 %v1262, 0.0
    %v1333 = vmax.f32 %v1267, 0.0
    %v1334 = vmax.f32 %v1272, 0.0
    %v1335 = vmax.f32 %v1277, 0.0
    %v1336 = vmax.f32 %v1282, 0.0
    %v1337 = vmax.f32 %v1287, 0.0
    %v1338 = vmax.f32 %v1292, 0.0
    %v1339 = vmax.f32 %v1297, 0.0
    %v1340 = vmax.f32 %v1302, 0.0
    %v1341 = vmax.f32 %v1307, 0.0
    %v1342 = vld [vmem:[%s4] sm:$0xff]
    %v1343 = vld [vmem:[%s4 + $0x8] sm:$0xff]
    %v1344 = vld [vmem:[%s4 + $0x10] sm:$0xff]
    %v1345 = vld [vmem:[%s4 + $0x18] sm:$0xff]
    %v1346 = vld [vmem:[%s4 + $0x20] sm:$0xff]
    %v1347 = vld [vmem:[%s4 + $0x28] sm:$0xff]
    %v1348 = vld [vmem:[%s4 + $0x30] sm:$0xff]
    %v1349 = vld [vmem:[%s4 + $0x38] sm:$0xff]
    %v1350 = vld [vmem:[%s4 + $0x40] sm:$0xff]
    %v1351 = vld [vmem:[%s4 + $0x48] sm:$0xff]
    %v1352 = vld [vmem:[%s4 + $0x50] sm:$0xff]
    %v1353 = vld [vmem:[%s4 + $0x58] sm:$0xff]
    %v1354 = vld [vmem:[%s4 + $0x60] sm:$0xff]
    %v1355 = vld [vmem:[%s4 + $0x68] sm:$0xff]
    %v1356 = vld [vmem:[%s4 + $0x70] sm:$0xff]
    %v1357 = vld [vmem:[%s4 + $0x78] sm:$0xff]
    %v1358 = vld [vmem:[%s5 + $0x3] sm:$0x1]
    %v1359 = vlaneseq
    %v1360 = vshrl.u32 %v1359, 7
    %v1361 = vsub.s32 0, %v1360
    %v1362 = vrot.slane %v1358, %v1361
    %1363 = vmatprep.subr.mxu0 0.0
    %1364 = vmatpush1.msra.mxu0 %v1342
    %1365 = vmatprep.subr.mxu0 0.0
    %1366 = vmatpush1.msra.mxu0 %v1343
    %1367 = vmatprep.subr.mxu0 0.0
    %1368 = vmatpush1.msra.mxu0 %v1344
    %1369 = vmatprep.subr.mxu0 0.0
    %1370 = vmatpush1.msra.mxu0 %v1345
    %1371 = vmatprep.subr.mxu0 0.0
    %1372 = vmatpush1.msra.mxu0 %v1346
    %1373 = vmatprep.subr.mxu0 0.0
    %1374 = vmatpush1.msra.mxu0 %v1347
    %1375 = vmatprep.subr.mxu0 0.0
    %1376 = vmatpush1.msra.mxu0 %v1348
    %1377 = vmatprep.subr.mxu0 0.0
    %1378 = vmatpush1.msra.mxu0 %v1349
    %1379 = vmatprep.subr.mxu0 0.0
    %1380 = vmatpush1.msra.mxu0 %v1350
    %1381 = vmatprep.subr.mxu0 0.0
    %1382 = vmatpush1.msra.mxu0 %v1351
    %1383 = vmatprep.subr.mxu0 0.0
    %1384 = vmatpush1.msra.mxu0 %v1352
    %1385 = vmatprep.subr.mxu0 0.0
    %1386 = vmatpush1.msra.mxu0 %v1353
    %1387 = vmatprep.subr.mxu0 0.0
    %1388 = vmatpush1.msra.mxu0 %v1354
    %1389 = vmatprep.subr.mxu0 0.0
    %1390 = vmatpush1.msra.mxu0 %v1355
    %1391 = vmatprep.subr.mxu0 0.0
    %1392 = vmatpush1.msra.mxu0 %v1356
    %1393 = vmatprep.subr.mxu0 0.0
    %1394 = vmatpush1.msra.mxu0 %v1357
    %1395 = vmatprep.subr.mxu0 0.0
    %1396 = vmatpush1.msra.mxu0 0.0
    %1397 = vmatprep.subr.mxu0 0.0
    %1398 = vmatpush1.msra.mxu0 0.0
    %1399 = vmatprep.subr.mxu0 0.0
    %1400 = vmatpush1.msra.mxu0 0.0
    %1401 = vmatprep.subr.mxu0 0.0
    %1402 = vmatpush1.msra.mxu0 0.0
    %1403 = vmatprep.subr.mxu0 0.0
    %1404 = vmatpush1.msra.mxu0 0.0
    %1405 = vmatprep.subr.mxu0 0.0
    %1406 = vmatpush1.msra.mxu0 0.0
    %1407 = vmatprep.subr.mxu0 0.0
    %1408 = vmatpush1.msra.mxu0 0.0
    %1409 = vmatprep.subr.mxu0 0.0
    %1410 = vmatpush1.msra.mxu0 0.0
    %1411 = vmatprep.subr.mxu0 0.0
    %1412 = vmatpush1.msra.mxu0 0.0
    %1413 = vmatprep.subr.mxu0 0.0
    %1414 = vmatpush1.msra.mxu0 0.0
    %1415 = vmatprep.subr.mxu0 0.0
    %1416 = vmatpush1.msra.mxu0 0.0
    %1417 = vmatprep.subr.mxu0 0.0
    %1418 = vmatpush1.msra.mxu0 0.0
    %1419 = vmatprep.subr.mxu0 0.0
    %1420 = vmatpush1.msra.mxu0 0.0
    %1421 = vmatprep.subr.mxu0 0.0
    %1422 = vmatpush1.msra.mxu0 0.0
    %1423 = vmatprep.subr.mxu0 0.0
    %1424 = vmatpush1.msra.mxu0 0.0
    %1425 = vmatprep.subr.mxu0 0.0
    %1426 = vmatpush1.msra.mxu0 0.0
    %1427 = vmatprep.mubr.f32.mxu0 0.0
    %1428 = vmatmul.mubr.f32.gmra.mrb[0].mxu0 %v1310
    %v1429 = vpop.f32.mrb[0].mxu0
    %v1430 = vadd.f32 %v1362, %v1429
    %v1431 = vpop.f32.mrb[0].mxu0
    %1432 = vmatprep.mubr.f32.mxu0 0.0
    %1433 = vmatmul.mubr.f32.gmra.mrb[0].mxu0 %v1311
    %v1434 = vpop.f32.mrb[0].mxu0
    %v1435 = vadd.f32 %v1362, %v1434
    %v1436 = vpop.f32.mrb[0].mxu0
    %1437 = vmatprep.mubr.f32.mxu0 0.0
    %1438 = vmatmul.mubr.f32.gmra.mrb[0].mxu0 %v1312
    %v1439 = vpop.f32.mrb[0].mxu0
    %v1440 = vadd.f32 %v1362, %v1439
    %v1441 = vpop.f32.mrb[0].mxu0
    %1442 = vmatprep.mubr.f32.mxu0 0.0
    %1443 = vmatmul.mubr.f32.gmra.mrb[0].mxu0 %v1313
    %v1444 = vpop.f32.mrb[0].mxu0
    %v1445 = vadd.f32 %v1362, %v1444
    %v1446 = vpop.f32.mrb[0].mxu0
    %1447 = vmatprep.mubr.f32.mxu0 0.0
    %1448 = vmatmul.mubr.f32.gmra.mrb[0].mxu0 %v1314
    %v1449 = vpop.f32.mrb[0].mxu0
    %v1450 = vadd.f32 %v1362, %v1449
    %v1451 = vpop.f32.mrb[0].mxu0
    %1452 = vmatprep.mubr.f32.mxu0 0.0
    %1453 = vmatmul.mubr.f32.gmra.mrb[0].mxu0 %v1315
    %v1454 = vpop.f32.mrb[0].mxu0
    %v1455 = vadd.f32 %v1362, %v1454
    %v1456 = vpop.f32.mrb[0].mxu0
    %1457 = vmatprep.mubr.f32.mxu0 0.0
    %1458 = vmatmul.mubr.f32.gmra.mrb[0].mxu0 %v1316
    %v1459 = vpop.f32.mrb[0].mxu0
    %v1460 = vadd.f32 %v1362, %v1459
    %v1461 = vpop.f32.mrb[0].mxu0
    %1462 = vmatprep.mubr.f32.mxu0 0.0
    %1463 = vmatmul.mubr.f32.gmra.mrb[0].mxu0 %v1317
    %v1464 = vpop.f32.mrb[0].mxu0
    %v1465 = vadd.f32 %v1362, %v1464
    %v1466 = vpop.f32.mrb[0].mxu0
    %1467 = vmatprep.mubr.f32.mxu0 0.0
    %1468 = vmatmul.mubr.f32.gmra.mrb[0].mxu0 %v1318
    %v1469 = vpop.f32.mrb[0].mxu0
    %v1470 = vadd.f32 %v1362, %v1469
    %v1471 = vpop.f32.mrb[0].mxu0
    %1472 = vmatprep.mubr.f32.mxu0 0.0
    %1473 = vmatmul.mubr.f32.gmra.mrb[0].mxu0 %v1319
    %v1474 = vpop.f32.mrb[0].mxu0
    %v1475 = vadd.f32 %v1362, %v1474
    %v1476 = vpop.f32.mrb[0].mxu0
    %1477 = vmatprep.mubr.f32.mxu0 0.0
    %1478 = vmatmul.mubr.f32.gmra.mrb[0].mxu0 %v1320
    %v1479 = vpop.f32.mrb[0].mxu0
    %v1480 = vadd.f32 %v1362, %v1479
    %v1481 = vpop.f32.mrb[0].mxu0
    %1482 = vmatprep.mubr.f32.mxu0 0.0
    %1483 = vmatmul.mubr.f32.gmra.mrb[0].mxu0 %v1321
    %v1484 = vpop.f32.mrb[0].mxu0
    %v1485 = vadd.f32 %v1362, %v1484
    %v1486 = vpop.f32.mrb[0].mxu0
    %1487 = vmatprep.mubr.f32.mxu0 0.0
    %1488 = vmatmul.mubr.f32.gmra.mrb[0].mxu0 %v1322
    %v1489 = vpop.f32.mrb[0].mxu0
    %v1490 = vadd.f32 %v1362, %v1489
    %v1491 = vpop.f32.mrb[0].mxu0
    %1492 = vmatprep.mubr.f32.mxu0 0.0
    %1493 = vmatmul.mubr.f32.gmra.mrb[0].mxu0 %v1323
    %v1494 = vpop.f32.mrb[0].mxu0
    %v1495 = vadd.f32 %v1362, %v1494
    %v1496 = vpop.f32.mrb[0].mxu0
    %1497 = vmatprep.mubr.f32.mxu0 0.0
    %1498 = vmatmul.mubr.f32.gmra.mrb[0].mxu0 %v1324
    %v1499 = vpop.f32.mrb[0].mxu0
    %v1500 = vadd.f32 %v1362, %v1499
    %v1501 = vpop.f32.mrb[0].mxu0
    %1502 = vmatprep.mubr.f32.mxu0 0.0
    %1503 = vmatmul.mubr.f32.gmra.mrb[0].mxu0 %v1325
    %v1504 = vpop.f32.mrb[0].mxu0
    %v1505 = vadd.f32 %v1362, %v1504
    %v1506 = vpop.f32.mrb[0].mxu0
    %1507 = vmatprep.mubr.f32.mxu0 0.0
    %1508 = vmatmul.mubr.f32.gmra.mrb[0].mxu0 %v1326
    %v1509 = vpop.f32.mrb[0].mxu0
    %v1510 = vadd.f32 %v1362, %v1509
    %v1511 = vpop.f32.mrb[0].mxu0
    %1512 = vmatprep.mubr.f32.mxu0 0.0
    %1513 = vmatmul.mubr.f32.gmra.mrb[0].mxu0 %v1327
    %v1514 = vpop.f32.mrb[0].mxu0
    %v1515 = vadd.f32 %v1362, %v1514
    %v1516 = vpop.f32.mrb[0].mxu0
    %1517 = vmatprep.mubr.f32.mxu0 0.0
    %1518 = vmatmul.mubr.f32.gmra.mrb[0].mxu0 %v1328
    %v1519 = vpop.f32.mrb[0].mxu0
    %v1520 = vadd.f32 %v1362, %v1519
    %v1521 = vpop.f32.mrb[0].mxu0
    %1522 = vmatprep.mubr.f32.mxu0 0.0
    %1523 = vmatmul.mubr.f32.gmra.mrb[0].mxu0 %v1329
    %v1524 = vpop.f32.mrb[0].mxu0
    %v1525 = vadd.f32 %v1362, %v1524
    %v1526 = vpop.f32.mrb[0].mxu0
    %1527 = vmatprep.mubr.f32.mxu0 0.0
    %1528 = vmatmul.mubr.f32.gmra.mrb[0].mxu0 %v1330
    %v1529 = vpop.f32.mrb[0].mxu0
    %v1530 = vadd.f32 %v1362, %v1529
    %v1531 = vpop.f32.mrb[0].mxu0
    %1532 = vmatprep.mubr.f32.mxu0 0.0
    %1533 = vmatmul.mubr.f32.gmra.mrb[0].mxu0 %v1331
    %v1534 = vpop.f32.mrb[0].mxu0
    %v1535 = vadd.f32 %v1362, %v1534
    %v1536 = vpop.f32.mrb[0].mxu0
    %1537 = vmatprep.mubr.f32.mxu0 0.0
    %1538 = vmatmul.mubr.f32.gmra.mrb[0].mxu0 %v1332
    %v1539 = vpop.f32.mrb[0].mxu0
    %v1540 = vadd.f32 %v1362, %v1539
    %v1541 = vpop.f32.mrb[0].mxu0
    %1542 = vmatprep.mubr.f32.mxu0 0.0
    %1543 = vmatmul.mubr.f32.gmra.mrb[0].mxu0 %v1333
    %v1544 = vpop.f32.mrb[0].mxu0
    %v1545 = vadd.f32 %v1362, %v1544
    %v1546 = vpop.f32.mrb[0].mxu0
    %1547 = vmatprep.mubr.f32.mxu0 0.0
    %1548 = vmatmul.mubr.f32.gmra.mrb[0].mxu0 %v1334
    %v1549 = vpop.f32.mrb[0].mxu0
    %v1550 = vadd.f32 %v1362, %v1549
    %v1551 = vpop.f32.mrb[0].mxu0
    %1552 = vmatprep.mubr.f32.mxu0 0.0
    %1553 = vmatmul.mubr.f32.gmra.mrb[0].mxu0 %v1335
    %v1554 = vpop.f32.mrb[0].mxu0
    %v1555 = vadd.f32 %v1362, %v1554
    %v1556 = vpop.f32.mrb[0].mxu0
    %1557 = vmatprep.mubr.f32.mxu0 0.0
    %1558 = vmatmul.mubr.f32.gmra.mrb[0].mxu0 %v1336
    %v1559 = vpop.f32.mrb[0].mxu0
    %v1560 = vadd.f32 %v1362, %v1559
    %v1561 = vpop.f32.mrb[0].mxu0
    %1562 = vmatprep.mubr.f32.mxu0 0.0
    %1563 = vmatmul.mubr.f32.gmra.mrb[0].mxu0 %v1337
    %v1564 = vpop.f32.mrb[0].mxu0
    %v1565 = vadd.f32 %v1362, %v1564
    %v1566 = vpop.f32.mrb[0].mxu0
    %1567 = vmatprep.mubr.f32.mxu0 0.0
    %1568 = vmatmul.mubr.f32.gmra.mrb[0].mxu0 %v1338
    %v1569 = vpop.f32.mrb[0].mxu0
    %v1570 = vadd.f32 %v1362, %v1569
    %v1571 = vpop.f32.mrb[0].mxu0
    %1572 = vmatprep.mubr.f32.mxu0 0.0
    %1573 = vmatmul.mubr.f32.gmra.mrb[0].mxu0 %v1339
    %v1574 = vpop.f32.mrb[0].mxu0
    %v1575 = vadd.f32 %v1362, %v1574
    %v1576 = vpop.f32.mrb[0].mxu0
    %1577 = vmatprep.mubr.f32.mxu0 0.0
    %1578 = vmatmul.mubr.f32.gmra.mrb[0].mxu0 %v1340
    %v1579 = vpop.f32.mrb[0].mxu0
    %v1580 = vadd.f32 %v1362, %v1579
    %v1581 = vpop.f32.mrb[0].mxu0
    %1582 = vmatprep.mubr.f32.mxu0 0.0
    %1583 = vmatmul.mubr.f32.gmra.mrb[0].mxu0 %v1341
    %v1584 = vpop.f32.mrb[0].mxu0
    %v1585 = vadd.f32 %v1362, %v1584
    %v1586 = vpop.f32.mrb[0].mxu0
    %1587 = vdwg.mxu0
    %1588 = vmax.xlane.f32.xlu0 %v1430
    %v1589 = vpop.xlane.xlu0 %1588
    %1590 = vmax.xlane.f32.xlu0 %v1435
    %v1591 = vpop.xlane.xlu0 %1590
    %1592 = vmax.xlane.f32.xlu0 %v1440
    %v1593 = vpop.xlane.xlu0 %1592
    %1594 = vmax.xlane.f32.xlu0 %v1445
    %v1595 = vpop.xlane.xlu0 %1594
    %1596 = vmax.xlane.f32.xlu0 %v1450
    %v1597 = vpop.xlane.xlu0 %1596
    %1598 = vmax.xlane.f32.xlu0 %v1455
    %v1599 = vpop.xlane.xlu0 %1598
    %1600 = vmax.xlane.f32.xlu0 %v1460
    %v1601 = vpop.xlane.xlu0 %1600
    %1602 = vmax.xlane.f32.xlu0 %v1465
    %v1603 = vpop.xlane.xlu0 %1602
    %1604 = vmax.xlane.f32.xlu0 %v1470
    %v1605 = vpop.xlane.xlu0 %1604
    %1606 = vmax.xlane.f32.xlu0 %v1475
    %v1607 = vpop.xlane.xlu0 %1606
    %1608 = vmax.xlane.f32.xlu0 %v1480
    %v1609 = vpop.xlane.xlu0 %1608
    %1610 = vmax.xlane.f32.xlu0 %v1485
    %v1611 = vpop.xlane.xlu0 %1610
    %1612 = vmax.xlane.f32.xlu0 %v1490
    %v1613 = vpop.xlane.xlu0 %1612
    %1614 = vmax.xlane.f32.xlu0 %v1495
    %v1615 = vpop.xlane.xlu0 %1614
    %1616 = vmax.xlane.f32.xlu0 %v1500
    %v1617 = vpop.xlane.xlu0 %1616
    %1618 = vmax.xlane.f32.xlu0 %v1505
    %v1619 = vpop.xlane.xlu0 %1618
    %1620 = vmax.xlane.f32.xlu0 %v1510
    %v1621 = vpop.xlane.xlu0 %1620
    %1622 = vmax.xlane.f32.xlu0 %v1515
    %v1623 = vpop.xlane.xlu0 %1622
    %1624 = vmax.xlane.f32.xlu0 %v1520
    %v1625 = vpop.xlane.xlu0 %1624
    %1626 = vmax.xlane.f32.xlu0 %v1525
    %v1627 = vpop.xlane.xlu0 %1626
    %1628 = vmax.xlane.f32.xlu0 %v1530
    %v1629 = vpop.xlane.xlu0 %1628
    %1630 = vmax.xlane.f32.xlu0 %v1535
    %v1631 = vpop.xlane.xlu0 %1630
    %1632 = vmax.xlane.f32.xlu0 %v1540
    %v1633 = vpop.xlane.xlu0 %1632
    %1634 = vmax.xlane.f32.xlu0 %v1545
    %v1635 = vpop.xlane.xlu0 %1634
    %1636 = vmax.xlane.f32.xlu0 %v1550
    %v1637 = vpop.xlane.xlu0 %1636
    %1638 = vmax.xlane.f32.xlu0 %v1555
    %v1639 = vpop.xlane.xlu0 %1638
    %1640 = vmax.xlane.f32.xlu0 %v1560
    %v1641 = vpop.xlane.xlu0 %1640
    %1642 = vmax.xlane.f32.xlu0 %v1565
    %v1643 = vpop.xlane.xlu0 %1642
    %1644 = vmax.xlane.f32.xlu0 %v1570
    %v1645 = vpop.xlane.xlu0 %1644
    %1646 = vmax.xlane.f32.xlu0 %v1575
    %v1647 = vpop.xlane.xlu0 %1646
    %1648 = vmax.xlane.f32.xlu0 %v1580
    %v1649 = vpop.xlane.xlu0 %1648
    %1650 = vmax.xlane.f32.xlu0 %v1585
    %v1651 = vpop.xlane.xlu0 %1650
    %v1652 = vsub.f32 %v1430, %v1589
    %v1653 = vsub.f32 %v1435, %v1591
    %v1654 = vsub.f32 %v1440, %v1593
    %v1655 = vsub.f32 %v1445, %v1595
    %v1656 = vsub.f32 %v1450, %v1597
    %v1657 = vsub.f32 %v1455, %v1599
    %v1658 = vsub.f32 %v1460, %v1601
    %v1659 = vsub.f32 %v1465, %v1603
    %v1660 = vsub.f32 %v1470, %v1605
    %v1661 = vsub.f32 %v1475, %v1607
    %v1662 = vsub.f32 %v1480, %v1609
    %v1663 = vsub.f32 %v1485, %v1611
    %v1664 = vsub.f32 %v1490, %v1613
    %v1665 = vsub.f32 %v1495, %v1615
    %v1666 = vsub.f32 %v1500, %v1617
    %v1667 = vsub.f32 %v1505, %v1619
    %v1668 = vsub.f32 %v1510, %v1621
    %v1669 = vsub.f32 %v1515, %v1623
    %v1670 = vsub.f32 %v1520, %v1625
    %v1671 = vsub.f32 %v1525, %v1627
    %v1672 = vsub.f32 %v1530, %v1629
    %v1673 = vsub.f32 %v1535, %v1631
    %v1674 = vsub.f32 %v1540, %v1633
    %v1675 = vsub.f32 %v1545, %v1635
    %v1676 = vsub.f32 %v1550, %v1637
    %v1677 = vsub.f32 %v1555, %v1639
    %v1678 = vsub.f32 %v1560, %v1641
    %v1679 = vsub.f32 %v1565, %v1643
    %v1680 = vsub.f32 %v1570, %v1645
    %v1681 = vsub.f32 %v1575, %v1647
    %v1682 = vsub.f32 %v1580, %v1649
    %v1683 = vsub.f32 %v1585, %v1651
    %v1684 = vmul.f32 %v1652, 1.442695
    %v1685 = vpow.pop %v1684
    %v1686 = vmul.f32 %v1653, 1.442695
    %v1687 = vpow.pop %v1686
    %v1688 = vmul.f32 %v1654, 1.442695
    %v1689 = vpow.pop %v1688
    %v1690 = vmul.f32 %v1655, 1.442695
    %v1691 = vpow.pop %v1690
    %v1692 = vmul.f32 %v1656, 1.442695
    %v1693 = vpow.pop %v1692
    %v1694 = vmul.f32 %v1657, 1.442695
    %v1695 = vpow.pop %v1694
    %v1696 = vmul.f32 %v1658, 1.442695
    %v1697 = vpow.pop %v1696
    %v1698 = vmul.f32 %v1659, 1.442695
    %v1699 = vpow.pop %v1698
    %v1700 = vmul.f32 %v1660, 1.442695
    %v1701 = vpow.pop %v1700
    %v1702 = vmul.f32 %v1661, 1.442695
    %v1703 = vpow.pop %v1702
    %v1704 = vmul.f32 %v1662, 1.442695
    %v1705 = vpow.pop %v1704
    %v1706 = vmul.f32 %v1663, 1.442695
    %v1707 = vpow.pop %v1706
    %v1708 = vmul.f32 %v1664, 1.442695
    %v1709 = vpow.pop %v1708
    %v1710 = vmul.f32 %v1665, 1.442695
    %v1711 = vpow.pop %v1710
    %v1712 = vmul.f32 %v1666, 1.442695
    %v1713 = vpow.pop %v1712
    %v1714 = vmul.f32 %v1667, 1.442695
    %v1715 = vpow.pop %v1714
    %v1716 = vmul.f32 %v1668, 1.442695
    %v1717 = vpow.pop %v1716
    %v1718 = vmul.f32 %v1669, 1.442695
    %v1719 = vpow.pop %v1718
    %v1720 = vmul.f32 %v1670, 1.442695
    %v1721 = vpow.pop %v1720
    %v1722 = vmul.f32 %v1671, 1.442695
    %v1723 = vpow.pop %v1722
    %v1724 = vmul.f32 %v1672, 1.442695
    %v1725 = vpow.pop %v1724
    %v1726 = vmul.f32 %v1673, 1.442695
    %v1727 = vpow.pop %v1726
    %v1728 = vmul.f32 %v1674, 1.442695
    %v1729 = vpow.pop %v1728
    %v1730 = vmul.f32 %v1675, 1.442695
    %v1731 = vpow.pop %v1730
    %v1732 = vmul.f32 %v1676, 1.442695
    %v1733 = vpow.pop %v1732
    %v1734 = vmul.f32 %v1677, 1.442695
    %v1735 = vpow.pop %v1734
    %v1736 = vmul.f32 %v1678, 1.442695
    %v1737 = vpow.pop %v1736
    %v1738 = vmul.f32 %v1679, 1.442695
    %v1739 = vpow.pop %v1738
    %v1740 = vmul.f32 %v1680, 1.442695
    %v1741 = vpow.pop %v1740
    %v1742 = vmul.f32 %v1681, 1.442695
    %v1743 = vpow.pop %v1742
    %v1744 = vmul.f32 %v1682, 1.442695
    %v1745 = vpow.pop %v1744
    %v1746 = vmul.f32 %v1683, 1.442695
    %v1747 = vpow.pop %v1746
    %1748 = vadd.xlane.f32.xlu0 %v1685
    %v1749 = vpop.xlane.xlu0 %1748
    %1750 = vadd.xlane.f32.xlu0 %v1687
    %v1751 = vpop.xlane.xlu0 %1750
    %1752 = vadd.xlane.f32.xlu0 %v1689
    %v1753 = vpop.xlane.xlu0 %1752
    %1754 = vadd.xlane.f32.xlu0 %v1691
    %v1755 = vpop.xlane.xlu0 %1754
    %1756 = vadd.xlane.f32.xlu0 %v1693
    %v1757 = vpop.xlane.xlu0 %1756
    %1758 = vadd.xlane.f32.xlu0 %v1695
    %v1759 = vpop.xlane.xlu0 %1758
    %1760 = vadd.xlane.f32.xlu0 %v1697
    %v1761 = vpop.xlane.xlu0 %1760
    %1762 = vadd.xlane.f32.xlu0 %v1699
    %v1763 = vpop.xlane.xlu0 %1762
    %1764 = vadd.xlane.f32.xlu0 %v1701
    %v1765 = vpop.xlane.xlu0 %1764
    %1766 = vadd.xlane.f32.xlu0 %v1703
    %v1767 = vpop.xlane.xlu0 %1766
    %1768 = vadd.xlane.f32.xlu0 %v1705
    %v1769 = vpop.xlane.xlu0 %1768
    %1770 = vadd.xlane.f32.xlu0 %v1707
    %v1771 = vpop.xlane.xlu0 %1770
    %1772 = vadd.xlane.f32.xlu0 %v1709
    %v1773 = vpop.xlane.xlu0 %1772
    %1774 = vadd.xlane.f32.xlu0 %v1711
    %v1775 = vpop.xlane.xlu0 %1774
    %1776 = vadd.xlane.f32.xlu0 %v1713
    %v1777 = vpop.xlane.xlu0 %1776
    %1778 = vadd.xlane.f32.xlu0 %v1715
    %v1779 = vpop.xlane.xlu0 %1778
    %1780 = vadd.xlane.f32.xlu0 %v1717
    %v1781 = vpop.xlane.xlu0 %1780
    %1782 = vadd.xlane.f32.xlu0 %v1719
    %v1783 = vpop.xlane.xlu0 %1782
    %1784 = vadd.xlane.f32.xlu0 %v1721
    %v1785 = vpop.xlane.xlu0 %1784
    %1786 = vadd.xlane.f32.xlu0 %v1723
    %v1787 = vpop.xlane.xlu0 %1786
    %1788 = vadd.xlane.f32.xlu0 %v1725
    %v1789 = vpop.xlane.xlu0 %1788
    %1790 = vadd.xlane.f32.xlu0 %v1727
    %v1791 = vpop.xlane.xlu0 %1790
    %1792 = vadd.xlane.f32.xlu0 %v1729
    %v1793 = vpop.xlane.xlu0 %1792
    %1794 = vadd.xlane.f32.xlu0 %v1731
    %v1795 = vpop.xlane.xlu0 %1794
    %1796 = vadd.xlane.f32.xlu0 %v1733
    %v1797 = vpop.xlane.xlu0 %1796
    %1798 = vadd.xlane.f32.xlu0 %v1735
    %v1799 = vpop.xlane.xlu0 %1798
    %1800 = vadd.xlane.f32.xlu0 %v1737
    %v1801 = vpop.xlane.xlu0 %1800
    %1802 = vadd.xlane.f32.xlu0 %v1739
    %v1803 = vpop.xlane.xlu0 %1802
    %1804 = vadd.xlane.f32.xlu0 %v1741
    %v1805 = vpop.xlane.xlu0 %1804
    %1806 = vadd.xlane.f32.xlu0 %v1743
    %v1807 = vpop.xlane.xlu0 %1806
    %1808 = vadd.xlane.f32.xlu0 %v1745
    %v1809 = vpop.xlane.xlu0 %1808
    %1810 = vadd.xlane.f32.xlu0 %v1747
    %v1811 = vpop.xlane.xlu0 %1810
    %v1812 = vrcp.pop %v1749
    %v1813 = vrcp.pop %v1751
    %v1814 = vrcp.pop %v1753
    %v1815 = vrcp.pop %v1755
    %v1816 = vrcp.pop %v1757
    %v1817 = vrcp.pop %v1759
    %v1818 = vrcp.pop %v1761
    %v1819 = vrcp.pop %v1763
    %v1820 = vrcp.pop %v1765
    %v1821 = vrcp.pop %v1767
    %v1822 = vrcp.pop %v1769
    %v1823 = vrcp.pop %v1771
    %v1824 = vrcp.pop %v1773
    %v1825 = vrcp.pop %v1775
    %v1826 = vrcp.pop %v1777
    %v1827 = vrcp.pop %v1779
    %v1828 = vrcp.pop %v1781
    %v1829 = vrcp.pop %v1783
    %v1830 = vrcp.pop %v1785
    %v1831 = vrcp.pop %v1787
    %v1832 = vrcp.pop %v1789
    %v1833 = vrcp.pop %v1791
    %v1834 = vrcp.pop %v1793
    %v1835 = vrcp.pop %v1795
    %v1836 = vrcp.pop %v1797
    %v1837 = vrcp.pop %v1799
    %v1838 = vrcp.pop %v1801
    %v1839 = vrcp.pop %v1803
    %v1840 = vrcp.pop %v1805
    %v1841 = vrcp.pop %v1807
    %v1842 = vrcp.pop %v1809
    %v1843 = vrcp.pop %v1811
    %v1844 = vmul.f32 %v1685, %v1812
    %v1845 = vmul.f32 %v1687, %v1813
    %v1846 = vmul.f32 %v1689, %v1814
    %v1847 = vmul.f32 %v1691, %v1815
    %v1848 = vmul.f32 %v1693, %v1816
    %v1849 = vmul.f32 %v1695, %v1817
    %v1850 = vmul.f32 %v1697, %v1818
    %v1851 = vmul.f32 %v1699, %v1819
    %v1852 = vmul.f32 %v1701, %v1820
    %v1853 = vmul.f32 %v1703, %v1821
    %v1854 = vmul.f32 %v1705, %v1822
    %v1855 = vmul.f32 %v1707, %v1823
    %v1856 = vmul.f32 %v1709, %v1824
    %v1857 = vmul.f32 %v1711, %v1825
    %v1858 = vmul.f32 %v1713, %v1826
    %v1859 = vmul.f32 %v1715, %v1827
    %v1860 = vmul.f32 %v1717, %v1828
    %v1861 = vmul.f32 %v1719, %v1829
    %v1862 = vmul.f32 %v1721, %v1830
    %v1863 = vmul.f32 %v1723, %v1831
    %v1864 = vmul.f32 %v1725, %v1832
    %v1865 = vmul.f32 %v1727, %v1833
    %v1866 = vmul.f32 %v1729, %v1834
    %v1867 = vmul.f32 %v1731, %v1835
    %v1868 = vmul.f32 %v1733, %v1836
    %v1869 = vmul.f32 %v1735, %v1837
    %v1870 = vmul.f32 %v1737, %v1838
    %v1871 = vmul.f32 %v1739, %v1839
    %v1872 = vmul.f32 %v1741, %v1840
    %v1873 = vmul.f32 %v1743, %v1841
    %v1874 = vmul.f32 %v1745, %v1842
    %v1875 = vmul.f32 %v1747, %v1843
    %1876 = vst [vmem:[#allocation2] sm:$0xff] %v1844
    %1877 = vst [vmem:[#allocation2 + $0x8] sm:$0xff] %v1845
    %1878 = vst [vmem:[#allocation2 + $0x10] sm:$0xff] %v1846
    %1879 = vst [vmem:[#allocation2 + $0x18] sm:$0xff] %v1847
    %1880 = vst [vmem:[#allocation2 + $0x20] sm:$0xff] %v1848
    %1881 = vst [vmem:[#allocation2 + $0x28] sm:$0xff] %v1849
    %1882 = vst [vmem:[#allocation2 + $0x30] sm:$0xff] %v1850
    %1883 = vst [vmem:[#allocation2 + $0x38] sm:$0xff] %v1851
    %1884 = vst [vmem:[#allocation2 + $0x40] sm:$0xff] %v1852
    %1885 = vst [vmem:[#allocation2 + $0x48] sm:$0xff] %v1853
    %1886 = vst [vmem:[#allocation2 + $0x50] sm:$0xff] %v1854
    %1887 = vst [vmem:[#allocation2 + $0x58] sm:$0xff] %v1855
    %1888 = vst [vmem:[#allocation2 + $0x60] sm:$0xff] %v1856
    %1889 = vst [vmem:[#allocation2 + $0x68] sm:$0xff] %v1857
    %1890 = vst [vmem:[#allocation2 + $0x70] sm:$0xff] %v1858
    %1891 = vst [vmem:[#allocation2 + $0x78] sm:$0xff] %v1859
    %1892 = vst [vmem:[#allocation2 + $0x80] sm:$0xff] %v1860
    %1893 = vst [vmem:[#allocation2 + $0x88] sm:$0xff] %v1861
    %1894 = vst [vmem:[#allocation2 + $0x90] sm:$0xff] %v1862
    %1895 = vst [vmem:[#allocation2 + $0x98] sm:$0xff] %v1863
    %1896 = vst [vmem:[#allocation2 + $0xa0] sm:$0xff] %v1864
    %1897 = vst [vmem:[#allocation2 + $0xa8] sm:$0xff] %v1865
    %1898 = vst [vmem:[#allocation2 + $0xb0] sm:$0xff] %v1866
    %1899 = vst [vmem:[#allocation2 + $0xb8] sm:$0xff] %v1867
    %1900 = vst [vmem:[#allocation2 + $0xc0] sm:$0xff] %v1868
    %1901 = vst [vmem:[#allocation2 + $0xc8] sm:$0xff] %v1869
    %1902 = vst [vmem:[#allocation2 + $0xd0] sm:$0xff] %v1870
    %1903 = vst [vmem:[#allocation2 + $0xd8] sm:$0xff] %v1871
    %1904 = vst [vmem:[#allocation2 + $0xe0] sm:$0xff] %v1872
    %1905 = vst [vmem:[#allocation2 + $0xe8] sm:$0xff] %v1873
    %1906 = vst [vmem:[#allocation2 + $0xf0] sm:$0xff] %v1874
    %1907 = vst [vmem:[#allocation2 + $0xf8] sm:$0xff] %v1875
    // Predicated region
    $region26: #{tpu_custom_call.1} parent=1 // pred_check
      _
    $region27: #{tpu_custom_call.1} parent=1 // pred_check_branch
      %1909 = sbr.rel (0) target = $region29
    $region28: #{tpu_custom_call.1} parent=1 // pred_region
      %s1911 = ssub.s32 4096, 4096
      %1912 = vsyncadd [#allocation3], %s1911
      %s1913 = sshll.u32 [#allocation2], 4
      %s1914 = int_to_ptr.vmem [resolvable:$true] %s1913
      %1919 = dma.vmem_to_hbm [thread:$0]  %s1914, 4096, %s6, [#allocation3], 128, 128, 8
    $region29: #{tpu_custom_call.1} parent=1 // pred_fallthru
      _
    // Predicated region
    $region30: #{tpu_custom_call.1} parent=1 // pred_check
      _
    $region31: #{tpu_custom_call.1} parent=1 // pred_check_branch
      %1921 = sbr.rel (0) target = $region33
    $region32: #{tpu_custom_call.1} parent=1 // pred_region
      %1922 = dma.done [#allocation3], 4096
    $region33: #{tpu_custom_call.1} parent=1 // pred_fallthru
      _
    %1923 = vsyncpa [#allocation3], 1

</llo_original>
